<compile_context>
chip_gen: v7x
topology: tpu7x:2x2x1
jax: 0.10.0
libtpu: 0.0.40
codegen_flags: <defaults>
</compile_context>

<pallas_src>
import functools

import jax
import jax.numpy as jnp
from jax.experimental import pallas as pl
from jax.experimental.pallas import tpu as pltpu


def _attention_kernel(x_ref, wqkv_ref, wproj_ref, bproj_ref, o_ref, hcat_ref,
                      *, num_heads, head_dim, n_valid):
    """One batch element per grid step.

    x_ref    : (1, Np, C)  bf16   (rows >= n_valid are zero padding)
    wqkv_ref : (C, 3C)     bf16   columns [Q | K | V], head-major; Q pre-scaled
    wproj_ref: (C, C)      bf16
    bproj_ref: (1, C)      f32
    o_ref    : (1, Np, C)  x.dtype
    hcat_ref : (Np, C)     bf16   VMEM scratch holding the concatenated heads
    """
    Np = x_ref.shape[1]
    C = x_ref.shape[2]
    Hd = head_dim

    x = x_ref[0]                                                   # (Np, C) bf16

    # --- fused QKV projection: K = C contraction, 3C-wide output (MXU) ---
    qkv = jnp.dot(x, wqkv_ref[...], preferred_element_type=jnp.float32)   # (Np, 3C) f32
    # Single bulk cast for the MXU operands of the attention matmuls.
    qkv_bf = qkv.astype(jnp.bfloat16)                              # (Np, 3C) bf16

    # Additive key-padding mask (valid keys are [0, n_valid)).
    if n_valid < Np:
        col = jax.lax.broadcasted_iota(jnp.int32, (1, Np), 1)
        key_bias = jnp.where(col < n_valid, 0.0, -1e30).astype(jnp.float32)  # (1, Np)
    else:
        key_bias = None

    # --- per-head scaled dot-product attention (unrolled, static slices) ---
    for h in range(num_heads):
        q = qkv_bf[:, 0 * C + h * Hd: 0 * C + (h + 1) * Hd]       # scale already folded in
        k = qkv_bf[:, 1 * C + h * Hd: 1 * C + (h + 1) * Hd]
        v = qkv_bf[:, 2 * C + h * Hd: 2 * C + (h + 1) * Hd]

        # scores = q @ k^T without materializing a transpose (contract last dims)
        s = jax.lax.dot_general(q, k, dimension_numbers=(((1,), (1,)), ((), ())),
                                preferred_element_type=jnp.float32)          # (Np, Np) f32
        if key_bias is not None:
            s = s + key_bias
        s = s - jnp.max(s, axis=-1, keepdims=True)
        p = jnp.exp(s)
        p = p * pl.reciprocal(jnp.sum(p, axis=-1, keepdims=True), approx=True)
        # attn_drop is a no-op (p = 0.0 / eval mode)

        out_h = jnp.dot(p.astype(jnp.bfloat16), v,
                        preferred_element_type=jnp.float32)                  # (Np, Hd) f32
        hcat_ref[:, h * Hd:(h + 1) * Hd] = out_h.astype(jnp.bfloat16)

    # --- fused output projection: one K = C matmul + bias ---
    y = jnp.dot(hcat_ref[...], wproj_ref[...], preferred_element_type=jnp.float32)
    y = y + bproj_ref[...].astype(jnp.float32)                     # (1, C) broadcast
    # proj_drop is a no-op (p = 0.0 / eval mode)
    o_ref[0] = y.astype(o_ref.dtype)


def prepare_attention_params(w_qkv, w_proj, b_proj, *, num_heads):
    """One-time parameter repacking (call at parameter-load time, not per forward).

    w_qkv: (C, 3C), w_proj: (C, C), b_proj: (1, C) -- already transposed relative
    to nn.Linear (i.e. the kernel computes y = x @ W + b = x @ weight.T + b).
    Column order of w_qkv matches the PyTorch reshape: [Q | K | V], head-major.
    """
    C = w_proj.shape[0]
    Hd = C // num_heads
    scale = Hd ** -0.5
    # Fold the softmax scale into the Q columns (zero in-kernel cost).
    w_qkv = w_qkv.astype(jnp.float32).at[:, :C].multiply(scale)
    return (w_qkv.astype(jnp.bfloat16),
            w_proj.astype(jnp.bfloat16),
            b_proj.reshape(1, C).astype(jnp.float32))


def attention_pallas(x, params, *, num_heads):
    """x: (B, N, C); params from prepare_attention_params."""
    w_qkv_bf, w_proj_bf, b_proj_f32 = params
    B, N, C = x.shape
    Hd = C // num_heads

    # Pad the sequence to a multiple of 128 (lane-dense key axis); padded key
    # columns are masked inside the kernel, padded query rows are sliced off.
    Np = ((N + 127) // 128) * 128
    x_bf = x.astype(jnp.bfloat16)
    if Np != N:
        x_bf = jnp.pad(x_bf, ((0, 0), (0, Np - N), (0, 0)))

    kernel = functools.partial(_attention_kernel,
                               num_heads=num_heads, head_dim=Hd, n_valid=N)

    y = pl.pallas_call(
        kernel,
        out_shape=jax.ShapeDtypeStruct((B, Np, C), x.dtype),
        grid=(B,),
        in_specs=[
            pl.BlockSpec((1, Np, C), lambda b: (b, 0, 0)),      # x[b] (padded)
            pl.BlockSpec((C, 3 * C), lambda b: (0, 0)),         # W_qkv, resident (fetched once)
            pl.BlockSpec((C, C), lambda b: (0, 0)),             # W_proj, resident
            pl.BlockSpec((1, C), lambda b: (0, 0)),             # proj bias, resident
        ],
        out_specs=pl.BlockSpec((1, Np, C), lambda b: (b, 0, 0)),
        scratch_shapes=[pltpu.VMEM((Np, C), jnp.bfloat16)],     # concatenated-heads buffer
        compiler_params=pltpu.CompilerParams(
            dimension_semantics=("parallel",),
            vmem_limit_bytes=32 * 1024 * 1024),
    )(x_bf, w_qkv_bf, w_proj_bf, b_proj_f32)

    return y[:, :N, :] if Np != N else y


def attention_reference(x, w_qkv, w_proj, b_proj, *, num_heads):
    """Pure-JAX (f32) reference mirroring the PyTorch forward."""
    B, N, C = x.shape
    Hd = C // num_heads
    scale = Hd ** -0.5
    qkv = x @ w_qkv                                              # (B, N, 3C)
    qkv = qkv.reshape(B, N, 3, num_heads, Hd).transpose(2, 0, 3, 1, 4)
    q, k, v = qkv[0], qkv[1], qkv[2]                             # (B, H, N, Hd)
    attn = jnp.einsum('bhnd,bhmd->bhnm', q, k) * scale
    attn = jax.nn.softmax(attn, axis=-1)
    out = jnp.einsum('bhnm,bhmd->bhnd', attn, v)
    out = out.transpose(0, 2, 1, 3).reshape(B, N, C)
    return out @ w_proj + b_proj[0]


if __name__ == "__main__":
    # small shapes consistent with the module: dim C divisible by num_heads
    B, N, C = 2, 16, 128
    num_heads = 4

    key = jax.random.PRNGKey(0)
    kx, kqkv, kproj, kb = jax.random.split(key, 4)

    x = jax.random.normal(kx, (B, N, C), dtype=jnp.float32)
    # deterministic synthetic parameters (nn.Linear-like scaling), already
    # transposed so that y = x @ W + b
    w_qkv = jax.random.normal(kqkv, (C, 3 * C), dtype=jnp.float32) * (1.0 / C ** 0.5)
    w_proj = jax.random.normal(kproj, (C, C), dtype=jnp.float32) * (1.0 / C ** 0.5)
    b_proj = jax.random.normal(kb, (1, C), dtype=jnp.float32) * 0.02

    # one-time parameter prep (hoisted out of the per-call path)
    params = prepare_attention_params(w_qkv, w_proj, b_proj, num_heads=num_heads)

    y = attention_pallas(x, params, num_heads=num_heads)
    y = jax.block_until_ready(y)

    y_ref = attention_reference(x, w_qkv, w_proj, b_proj, num_heads=num_heads)
    assert y.shape == (B, N, C)
    # bf16 MXU operands (f32 accumulation) + approx reciprocal -> loose tolerance
    max_err = jnp.max(jnp.abs(y - y_ref))
    assert jnp.allclose(y, y_ref, atol=5e-2, rtol=5e-2), \
        f"mismatch vs reference, max abs err={max_err}"

    print("KERNEL_OK")
</pallas_src>

<mosaic_0001>
module attributes {stable_mosaic.version = 11 : i64} {
  func.func @_attention_kernel(%arg0: i32, %arg1: memref<1x128x128xbf16, #tpu.memory_space<vmem>>, %arg2: memref<128x384xbf16, #tpu.memory_space<vmem>>, %arg3: memref<128x128xbf16, #tpu.memory_space<vmem>>, %arg4: memref<1x128xf32, #tpu.memory_space<vmem>>, %arg5: memref<1x128x128xf32, #tpu.memory_space<vmem>>, %arg6: memref<128x128xbf16, #tpu.memory_space<vmem>>) attributes {dimension_semantics = [#tpu.dimension_semantics<parallel>], iteration_bounds = array<i64: 2>, scalar_prefetch = 0 : i64, scratch_operands = 1 : i64, tpu.core_type = #tpu.core_type<tc>, window_params = [{transform_indices = @transform_0, window_bounds = array<i64: 1, 128, 128>}, {pipeline_mode = #tpu.pipeline_mode<synchronous>, transform_indices = @transform_1, window_bounds = array<i64: 128, 384>}, {pipeline_mode = #tpu.pipeline_mode<synchronous>, transform_indices = @transform_2, window_bounds = array<i64: 128, 128>}, {pipeline_mode = #tpu.pipeline_mode<synchronous>, transform_indices = @transform_3, window_bounds = array<i64: 1, 128>}, {transform_indices = @transform_4, window_bounds = array<i64: 1, 128, 128>}]} {
    %c0 = arith.constant 0 : index
    %c0_0 = arith.constant 0 : index
    %c0_1 = arith.constant 0 : index
    %0 = vector.load %arg1[%c0, %c0_0, %c0_1] : memref<1x128x128xbf16, #tpu.memory_space<vmem>>, vector<1x128x128xbf16>
    %1 = vector.shape_cast %0 : vector<1x128x128xbf16> to vector<128x128xbf16>
    %c0_2 = arith.constant 0 : index
    %c0_3 = arith.constant 0 : index
    %2 = vector.load %arg2[%c0_2, %c0_3] : memref<128x384xbf16, #tpu.memory_space<vmem>>, vector<128x384xbf16>
    %cst = arith.constant dense<0.000000e+00> : vector<128x384xf32>
    %3 = tpu.matmul %1, %2, %cst {dimension_numbers = #tpu.dot_dimension_numbers<[1], [0], [0], [1], [0, 0, 1, 1], [], []>} : vector<128x128xbf16>, vector<128x384xbf16>, vector<128x384xf32> -> vector<128x384xf32>
    %4 = arith.truncf %3 : vector<128x384xf32> to vector<128x384xbf16>
    %5 = tpu.iota {dimensions = array<i32: 1>} : vector<1x128xi32>
    %c16_i32 = arith.constant 16 : i32
    %6 = vector.broadcast %c16_i32 : i32 to vector<1x128xi32>
    %7 = arith.cmpi slt, %5, %6 : vector<1x128xi32>
    %cst_4 = arith.constant 0.000000e+00 : f32
    %cst_5 = arith.constant -1.000000e+30 : f32
    %8 = vector.broadcast %cst_4 : f32 to vector<1x128xf32>
    %9 = vector.broadcast %cst_5 : f32 to vector<1x128xf32>
    %10 = arith.select %7, %8, %9 : vector<1x128xi1>, vector<1x128xf32>
    %11 = vector.extract_strided_slice %4 {offsets = [0, 0], sizes = [128, 32], strides = [1, 1]} : vector<128x384xbf16> to vector<128x32xbf16>
    %12 = vector.extract_strided_slice %4 {offsets = [0, 128], sizes = [128, 32], strides = [1, 1]} : vector<128x384xbf16> to vector<128x32xbf16>
    %13 = vector.extract_strided_slice %4 {offsets = [0, 256], sizes = [128, 32], strides = [1, 1]} : vector<128x384xbf16> to vector<128x32xbf16>
    %cst_6 = arith.constant dense<0.000000e+00> : vector<128x128xf32>
    %14 = tpu.matmul %11, %12, %cst_6 {dimension_numbers = #tpu.dot_dimension_numbers<[1], [1], [0], [0], [0, 0, 1, 0], [], []>} : vector<128x32xbf16>, vector<128x32xbf16>, vector<128x128xf32> -> vector<128x128xf32>
    %15 = vector.broadcast %10 : vector<1x128xf32> to vector<128x128xf32>
    %16 = arith.addf %14, %15 : vector<128x128xf32>
    %cst_7 = arith.constant dense<0xFF800000> : vector<128xf32>
    %17 = vector.multi_reduction <maximumf>, %16, %cst_7 [1] : vector<128x128xf32> to vector<128xf32>
    %18 = vector.shape_cast %17 : vector<128xf32> to vector<128x1xf32>
    %19 = vector.broadcast %18 : vector<128x1xf32> to vector<128x128xf32>
    %20 = arith.subf %16, %19 : vector<128x128xf32>
    %21 = math.exp %20 : vector<128x128xf32>
    %cst_8 = arith.constant dense<0.000000e+00> : vector<128xf32>
    %22 = vector.multi_reduction <add>, %21, %cst_8 [1] : vector<128x128xf32> to vector<128xf32>
    %23 = vector.shape_cast %22 : vector<128xf32> to vector<128x1xf32>
    %24 = tpu.reciprocal %23 {approx = true} : vector<128x1xf32> -> vector<128x1xf32>
    %25 = vector.broadcast %24 : vector<128x1xf32> to vector<128x128xf32>
    %26 = arith.mulf %21, %25 : vector<128x128xf32>
    %27 = arith.truncf %26 : vector<128x128xf32> to vector<128x128xbf16>
    %cst_9 = arith.constant dense<0.000000e+00> : vector<128x32xf32>
    %28 = tpu.matmul %27, %13, %cst_9 {dimension_numbers = #tpu.dot_dimension_numbers<[1], [0], [0], [1], [0, 0, 1, 1], [], []>} : vector<128x128xbf16>, vector<128x32xbf16>, vector<128x32xf32> -> vector<128x32xf32>
    %29 = arith.truncf %28 : vector<128x32xf32> to vector<128x32xbf16>
    %c0_10 = arith.constant 0 : index
    %c0_11 = arith.constant 0 : index
    %30 = vector.load %arg6[%c0_10, %c0_11] : memref<128x128xbf16, #tpu.memory_space<vmem>>, vector<128x32xbf16>
    tpu.vector_store %arg6[%c0_10, %c0_11], %29 {strides = array<i32>} : memref<128x128xbf16, #tpu.memory_space<vmem>>, vector<128x32xbf16>,
    %31 = vector.extract_strided_slice %4 {offsets = [0, 32], sizes = [128, 32], strides = [1, 1]} : vector<128x384xbf16> to vector<128x32xbf16>
    %32 = vector.extract_strided_slice %4 {offsets = [0, 160], sizes = [128, 32], strides = [1, 1]} : vector<128x384xbf16> to vector<128x32xbf16>
    %33 = vector.extract_strided_slice %4 {offsets = [0, 288], sizes = [128, 32], strides = [1, 1]} : vector<128x384xbf16> to vector<128x32xbf16>
    %cst_12 = arith.constant dense<0.000000e+00> : vector<128x128xf32>
    %34 = tpu.matmul %31, %32, %cst_12 {dimension_numbers = #tpu.dot_dimension_numbers<[1], [1], [0], [0], [0, 0, 1, 0], [], []>} : vector<128x32xbf16>, vector<128x32xbf16>, vector<128x128xf32> -> vector<128x128xf32>
    %35 = vector.broadcast %10 : vector<1x128xf32> to vector<128x128xf32>
    %36 = arith.addf %34, %35 : vector<128x128xf32>
    %cst_13 = arith.constant dense<0xFF800000> : vector<128xf32>
    %37 = vector.multi_reduction <maximumf>, %36, %cst_13 [1] : vector<128x128xf32> to vector<128xf32>
    %38 = vector.shape_cast %37 : vector<128xf32> to vector<128x1xf32>
    %39 = vector.broadcast %38 : vector<128x1xf32> to vector<128x128xf32>
    %40 = arith.subf %36, %39 : vector<128x128xf32>
    %41 = math.exp %40 : vector<128x128xf32>
    %cst_14 = arith.constant dense<0.000000e+00> : vector<128xf32>
    %42 = vector.multi_reduction <add>, %41, %cst_14 [1] : vector<128x128xf32> to vector<128xf32>
    %43 = vector.shape_cast %42 : vector<128xf32> to vector<128x1xf32>
    %44 = tpu.reciprocal %43 {approx = true} : vector<128x1xf32> -> vector<128x1xf32>
    %45 = vector.broadcast %44 : vector<128x1xf32> to vector<128x128xf32>
    %46 = arith.mulf %41, %45 : vector<128x128xf32>
    %47 = arith.truncf %46 : vector<128x128xf32> to vector<128x128xbf16>
    %cst_15 = arith.constant dense<0.000000e+00> : vector<128x32xf32>
    %48 = tpu.matmul %47, %33, %cst_15 {dimension_numbers = #tpu.dot_dimension_numbers<[1], [0], [0], [1], [0, 0, 1, 1], [], []>} : vector<128x128xbf16>, vector<128x32xbf16>, vector<128x32xf32> -> vector<128x32xf32>
    %49 = arith.truncf %48 : vector<128x32xf32> to vector<128x32xbf16>
    %c0_16 = arith.constant 0 : index
    %c32 = arith.constant 32 : index
    %50 = vector.load %arg6[%c0_16, %c32] : memref<128x128xbf16, #tpu.memory_space<vmem>>, vector<128x32xbf16>
    tpu.vector_store %arg6[%c0_16, %c32], %49 {strides = array<i32>} : memref<128x128xbf16, #tpu.memory_space<vmem>>, vector<128x32xbf16>,
    %51 = vector.extract_strided_slice %4 {offsets = [0, 64], sizes = [128, 32], strides = [1, 1]} : vector<128x384xbf16> to vector<128x32xbf16>
    %52 = vector.extract_strided_slice %4 {offsets = [0, 192], sizes = [128, 32], strides = [1, 1]} : vector<128x384xbf16> to vector<128x32xbf16>
    %53 = vector.extract_strided_slice %4 {offsets = [0, 320], sizes = [128, 32], strides = [1, 1]} : vector<128x384xbf16> to vector<128x32xbf16>
    %cst_17 = arith.constant dense<0.000000e+00> : vector<128x128xf32>
    %54 = tpu.matmul %51, %52, %cst_17 {dimension_numbers = #tpu.dot_dimension_numbers<[1], [1], [0], [0], [0, 0, 1, 0], [], []>} : vector<128x32xbf16>, vector<128x32xbf16>, vector<128x128xf32> -> vector<128x128xf32>
    %55 = vector.broadcast %10 : vector<1x128xf32> to vector<128x128xf32>
    %56 = arith.addf %54, %55 : vector<128x128xf32>
    %cst_18 = arith.constant dense<0xFF800000> : vector<128xf32>
    %57 = vector.multi_reduction <maximumf>, %56, %cst_18 [1] : vector<128x128xf32> to vector<128xf32>
    %58 = vector.shape_cast %57 : vector<128xf32> to vector<128x1xf32>
    %59 = vector.broadcast %58 : vector<128x1xf32> to vector<128x128xf32>
    %60 = arith.subf %56, %59 : vector<128x128xf32>
    %61 = math.exp %60 : vector<128x128xf32>
    %cst_19 = arith.constant dense<0.000000e+00> : vector<128xf32>
    %62 = vector.multi_reduction <add>, %61, %cst_19 [1] : vector<128x128xf32> to vector<128xf32>
    %63 = vector.shape_cast %62 : vector<128xf32> to vector<128x1xf32>
    %64 = tpu.reciprocal %63 {approx = true} : vector<128x1xf32> -> vector<128x1xf32>
    %65 = vector.broadcast %64 : vector<128x1xf32> to vector<128x128xf32>
    %66 = arith.mulf %61, %65 : vector<128x128xf32>
    %67 = arith.truncf %66 : vector<128x128xf32> to vector<128x128xbf16>
    %cst_20 = arith.constant dense<0.000000e+00> : vector<128x32xf32>
    %68 = tpu.matmul %67, %53, %cst_20 {dimension_numbers = #tpu.dot_dimension_numbers<[1], [0], [0], [1], [0, 0, 1, 1], [], []>} : vector<128x128xbf16>, vector<128x32xbf16>, vector<128x32xf32> -> vector<128x32xf32>
    %69 = arith.truncf %68 : vector<128x32xf32> to vector<128x32xbf16>
    %c0_21 = arith.constant 0 : index
    %c64 = arith.constant 64 : index
    %70 = vector.load %arg6[%c0_21, %c64] : memref<128x128xbf16, #tpu.memory_space<vmem>>, vector<128x32xbf16>
    tpu.vector_store %arg6[%c0_21, %c64], %69 {strides = array<i32>} : memref<128x128xbf16, #tpu.memory_space<vmem>>, vector<128x32xbf16>,
    %71 = vector.extract_strided_slice %4 {offsets = [0, 96], sizes = [128, 32], strides = [1, 1]} : vector<128x384xbf16> to vector<128x32xbf16>
    %72 = vector.extract_strided_slice %4 {offsets = [0, 224], sizes = [128, 32], strides = [1, 1]} : vector<128x384xbf16> to vector<128x32xbf16>
    %73 = vector.extract_strided_slice %4 {offsets = [0, 352], sizes = [128, 32], strides = [1, 1]} : vector<128x384xbf16> to vector<128x32xbf16>
    %cst_22 = arith.constant dense<0.000000e+00> : vector<128x128xf32>
    %74 = tpu.matmul %71, %72, %cst_22 {dimension_numbers = #tpu.dot_dimension_numbers<[1], [1], [0], [0], [0, 0, 1, 0], [], []>} : vector<128x32xbf16>, vector<128x32xbf16>, vector<128x128xf32> -> vector<128x128xf32>
    %75 = vector.broadcast %10 : vector<1x128xf32> to vector<128x128xf32>
    %76 = arith.addf %74, %75 : vector<128x128xf32>
    %cst_23 = arith.constant dense<0xFF800000> : vector<128xf32>
    %77 = vector.multi_reduction <maximumf>, %76, %cst_23 [1] : vector<128x128xf32> to vector<128xf32>
    %78 = vector.shape_cast %77 : vector<128xf32> to vector<128x1xf32>
    %79 = vector.broadcast %78 : vector<128x1xf32> to vector<128x128xf32>
    %80 = arith.subf %76, %79 : vector<128x128xf32>
    %81 = math.exp %80 : vector<128x128xf32>
    %cst_24 = arith.constant dense<0.000000e+00> : vector<128xf32>
    %82 = vector.multi_reduction <add>, %81, %cst_24 [1] : vector<128x128xf32> to vector<128xf32>
    %83 = vector.shape_cast %82 : vector<128xf32> to vector<128x1xf32>
    %84 = tpu.reciprocal %83 {approx = true} : vector<128x1xf32> -> vector<128x1xf32>
    %85 = vector.broadcast %84 : vector<128x1xf32> to vector<128x128xf32>
    %86 = arith.mulf %81, %85 : vector<128x128xf32>
    %87 = arith.truncf %86 : vector<128x128xf32> to vector<128x128xbf16>
    %cst_25 = arith.constant dense<0.000000e+00> : vector<128x32xf32>
    %88 = tpu.matmul %87, %73, %cst_25 {dimension_numbers = #tpu.dot_dimension_numbers<[1], [0], [0], [1], [0, 0, 1, 1], [], []>} : vector<128x128xbf16>, vector<128x32xbf16>, vector<128x32xf32> -> vector<128x32xf32>
    %89 = arith.truncf %88 : vector<128x32xf32> to vector<128x32xbf16>
    %c0_26 = arith.constant 0 : index
    %c96 = arith.constant 96 : index
    %90 = vector.load %arg6[%c0_26, %c96] : memref<128x128xbf16, #tpu.memory_space<vmem>>, vector<128x32xbf16>
    tpu.vector_store %arg6[%c0_26, %c96], %89 {strides = array<i32>} : memref<128x128xbf16, #tpu.memory_space<vmem>>, vector<128x32xbf16>,
    %c0_27 = arith.constant 0 : index
    %c0_28 = arith.constant 0 : index
    %91 = vector.load %arg6[%c0_27, %c0_28] : memref<128x128xbf16, #tpu.memory_space<vmem>>, vector<128x128xbf16>
    %c0_29 = arith.constant 0 : index
    %c0_30 = arith.constant 0 : index
    %92 = vector.load %arg3[%c0_29, %c0_30] : memref<128x128xbf16, #tpu.memory_space<vmem>>, vector<128x128xbf16>
    %cst_31 = arith.constant dense<0.000000e+00> : vector<128x128xf32>
    %93 = tpu.matmul %91, %92, %cst_31 {dimension_numbers = #tpu.dot_dimension_numbers<[1], [0], [0], [1], [0, 0, 1, 1], [], []>} : vector<128x128xbf16>, vector<128x128xbf16>, vector<128x128xf32> -> vector<128x128xf32>
    %c0_32 = arith.constant 0 : index
    %c0_33 = arith.constant 0 : index
    %94 = vector.load %arg4[%c0_32, %c0_33] : memref<1x128xf32, #tpu.memory_space<vmem>>, vector<1x128xf32>
    %95 = vector.broadcast %94 : vector<1x128xf32> to vector<128x128xf32>
    %96 = arith.addf %93, %95 : vector<128x128xf32>
    %c0_34 = arith.constant 0 : index
    %c0_35 = arith.constant 0 : index
    %c0_36 = arith.constant 0 : index
    %97 = vector.load %arg5[%c0_34, %c0_35, %c0_36] : memref<1x128x128xf32, #tpu.memory_space<vmem>>, vector<1x128x128xf32>
    %98 = vector.shape_cast %97 : vector<1x128x128xf32> to vector<128x128xf32>
    %99 = vector.shape_cast %96 : vector<128x128xf32> to vector<1x128x128xf32>
    tpu.vector_store %arg5[%c0_34, %c0_35, %c0_36], %99 {strides = array<i32>} : memref<1x128x128xf32, #tpu.memory_space<vmem>>, vector<1x128x128xf32>,
    return
  }
  func.func @transform_0(%arg0: i32) -> (i32, i32, i32) {
    %c0_i32 = arith.constant 0 : i32
    %c0_i32_0 = arith.constant 0 : i32
    %c0_i32_1 = arith.constant 0 : i32
    return %arg0, %c0_i32, %c0_i32_0 : i32, i32, i32
  }
  func.func @transform_1(%arg0: i32) -> (i32, i32) {
    %c0_i32 = arith.constant 0 : i32
    %c0_i32_0 = arith.constant 0 : i32
    %c0_i32_1 = arith.constant 0 : i32
    return %c0_i32, %c0_i32_0 : i32, i32
  }
  func.func @transform_2(%arg0: i32) -> (i32, i32) {
    %c0_i32 = arith.constant 0 : i32
    %c0_i32_0 = arith.constant 0 : i32
    %c0_i32_1 = arith.constant 0 : i32
    return %c0_i32, %c0_i32_0 : i32, i32
  }
  func.func @transform_3(%arg0: i32) -> (i32, i32) {
    %c0_i32 = arith.constant 0 : i32
    %c0_i32_0 = arith.constant 0 : i32
    %c0_i32_1 = arith.constant 0 : i32
    return %c0_i32, %c0_i32_0 : i32, i32
  }
  func.func @transform_4(%arg0: i32) -> (i32, i32, i32) {
    %c0_i32 = arith.constant 0 : i32
    %c0_i32_0 = arith.constant 0 : i32
    %c0_i32_1 = arith.constant 0 : i32
    return %arg0, %c0_i32, %c0_i32_0 : i32, i32, i32
  }
}

</mosaic_0001>

<llo_original>
// kernel: tpu_custom_call.1
$region0: #{tpu_custom_call.1}
  #allocation0 [shape = 'u32[]', space=smem, size = 0x4, offset = 0x4, fixed_abs, tag = 'smem constant byte address 0x4 - core index']
  #allocation1 [shape = 'u32[144,128]{1,0:T(1,128)}', space=vmem, size = 0x12000, scoped, tag = 'internal scratch']
  #allocation2 [shape = 'bf16[128,128]{1,0:T(16,128)(2,1)}', space=vmem, size = 0x8000, scoped, tag = 'scratch operand']
  %s0 = inlined_call_operand.hbm [shape: bf16[2,128,128], index: 0, kind: input, shape index: {}]
  %s1 = inlined_call_operand.hbm [shape: bf16[128,384], index: 1, kind: input, shape index: {}]
  %s2 = inlined_call_operand.hbm [shape: bf16[128,128], index: 2, kind: input, shape index: {}]
  %s3 = inlined_call_operand.vmem [shape: f32[1,128], index: 3, kind: input, shape index: {}]
  %s4 = inlined_call_operand.hbm [shape: f32[2,128,128], index: 4, kind: output, shape index: {}]
  %s5 = sld [smem:[#allocation0]]
  $region61: #{tpu_custom_call.1} parent=0
    _
  %s7 = ssub.s32 1, %s5
  %s8 = scalar_select 0, %s7, %s5
  $region1: #{tpu_custom_call.1} parent=0
    #allocation3 [shape = 'u8[65536]{0}', space=vmem, size = 0x10000, scoped, tag = 'input window, operand 0']
    #allocation4 [shape = 's32[2]{0}', space=sflag, size = 0x8, scoped, tag = 'scoped memory for tpu_custom_call.1']
    #allocation5 [shape = 's32[2]{0}', space=sflag, size = 0x8, scoped, tag = 'scoped memory for tpu_custom_call.1']
    #allocation6 [shape = 'u8[98304]{0}', space=vmem, size = 0x18000, scoped, tag = 'input window, operand 1, single buffered']
    #allocation7 [shape = 's32[1]{0}', space=sflag, size = 0x4, scoped, tag = 'scoped memory for tpu_custom_call.1']
    #allocation8 [shape = 'u8[32768]{0}', space=vmem, size = 0x8000, scoped, tag = 'input window, operand 2, single buffered']
    #allocation9 [shape = 'u8[131072]{0}', space=vmem, size = 0x20000, scoped, tag = 'output window, operand 0']
    %9 = vsyncpa [#allocation4], 0
    %s10 = scalar_lea.sflag [#allocation4], 1
    %11 = vsyncpa %s10, 0
    %12 = vsyncpa [#allocation7], 0
    %13 = vsyncpa [#allocation5], 0
    %s14 = scalar_lea.sflag [#allocation5], 1
    %15 = vsyncpa %s14, 0
    loop: start=0, step=1, limit=4
    $region2: #{tpu_custom_call.1} parent=1 // loop_pre_header
      _
    $region3: #{tpu_custom_call.1} parent=1 // loop_header
      %s17 = sphi 0, %s21
      %p18 = scmp.ge.s32.totalorder %s17, 4
      %s27 = sphi 0, %s29
      %s30 = sphi 0, %s27
      %s31 = sphi 0, %s30
      %s47 = sphi 0, %s31
      %s51 = sphi 0, %s51
      %s53 = sphi 0, %s51
      %s54 = sphi 0, %s53
      %s68 = sphi 0, %s54
      %s72 = sphi 0, %s72
      %s74 = sphi 0, %s72
      %s75 = sphi 0, %s74
      %s89 = sphi 0, %s75
      %s93 = sphi 0, %s93
      %s95 = sphi 0, %s93
      %s96 = sphi 0, %s95
      %s110 = sphi 0, %s96
      %s116 = sphi 0, %s118
      %s119 = sphi 0, %s116
      %s120 = sphi 0, %s119
      %s136 = sphi 0, %s120
    $region4: #{tpu_custom_call.1} parent=1 // loop_header_branch
      %20 = sbr.rel (%p18) target = $region8
    $region5: #{tpu_custom_call.1} parent=1 // loop_body
      %s22 = ssub.s32 %s17, 1
      %s23 = ssub.s32 %s17, 2
      %s24 = sadd.s32 %s17, 1
      %s25 = ssub.s32 %s17, %s24
      %p26 = scmp.eq.s32.totalorder %s25, 0
      %s28 = sadd.s32 %s27, 1
      %s29 = scalar_select %p26, %s27, %s28
      %p32 = pneg %p26
      %p33 = scmp.eq.s32.totalorder %s17, 1
      %p34 = por %p32, %p33
      %p35 = scmp.ne.s32.totalorder %s27, %s30
      %p36 = scmp.eq.s32.totalorder %s17, 0
      %p37 = por %p35, %p36
      %p38 = scmp.ne.s32.totalorder %s27, %s30
      %p39 = scmp.eq.s32.totalorder %s22, 1
      %p40 = por %p38, %p39
      %p41 = scmp.ne.s32.totalorder %s30, %s31
      %p42 = scmp.eq.s32.totalorder %s22, 0
      %p43 = por %p41, %p42
      %p44 = scmp.ne.s32.totalorder %s30, %s31
      %p45 = scmp.eq.s32.totalorder %s23, 1
      %p46 = por %p44, %p45
      %p48 = scmp.ne.s32.totalorder %s31, %s47
      %p49 = scmp.eq.s32.totalorder %s23, 0
      %p50 = por %p48, %p49
      %s52 = sadd.s32 %s51, 1
      %p55 = scmp.eq.s32.totalorder %s17, 1
      %p56 = scmp.ne.s32.totalorder %s51, %s53
      %p57 = scmp.eq.s32.totalorder %s17, 0
      %p58 = por %p56, %p57
      %p59 = scmp.ne.s32.totalorder %s51, %s53
      %p60 = scmp.eq.s32.totalorder %s22, 1
      %p61 = por %p59, %p60
      %p62 = scmp.ne.s32.totalorder %s53, %s54
      %p63 = scmp.eq.s32.totalorder %s22, 0
      %p64 = por %p62, %p63
      %p65 = scmp.ne.s32.totalorder %s53, %s54
      %p66 = scmp.eq.s32.totalorder %s23, 1
      %p67 = por %p65, %p66
      %p69 = scmp.ne.s32.totalorder %s54, %s68
      %p70 = scmp.eq.s32.totalorder %s23, 0
      %p71 = por %p69, %p70
      %s73 = sadd.s32 %s72, 1
      %p76 = scmp.eq.s32.totalorder %s17, 1
      %p77 = scmp.ne.s32.totalorder %s72, %s74
      %p78 = scmp.eq.s32.totalorder %s17, 0
      %p79 = por %p77, %p78
      %p80 = scmp.ne.s32.totalorder %s72, %s74
      %p81 = scmp.eq.s32.totalorder %s22, 1
      %p82 = por %p80, %p81
      %p83 = scmp.ne.s32.totalorder %s74, %s75
      %p84 = scmp.eq.s32.totalorder %s22, 0
      %p85 = por %p83, %p84
      %p86 = scmp.ne.s32.totalorder %s74, %s75
      %p87 = scmp.eq.s32.totalorder %s23, 1
      %p88 = por %p86, %p87
      %p90 = scmp.ne.s32.totalorder %s75, %s89
      %p91 = scmp.eq.s32.totalorder %s23, 0
      %p92 = por %p90, %p91
      %s94 = sadd.s32 %s93, 1
      %p97 = scmp.eq.s32.totalorder %s17, 1
      %p98 = scmp.ne.s32.totalorder %s93, %s95
      %p99 = scmp.eq.s32.totalorder %s17, 0
      %p100 = por %p98, %p99
      %p101 = scmp.ne.s32.totalorder %s93, %s95
      %p102 = scmp.eq.s32.totalorder %s22, 1
      %p103 = por %p101, %p102
      %p104 = scmp.ne.s32.totalorder %s95, %s96
      %p105 = scmp.eq.s32.totalorder %s22, 0
      %p106 = por %p104, %p105
      %p107 = scmp.ne.s32.totalorder %s95, %s96
      %p108 = scmp.eq.s32.totalorder %s23, 1
      %p109 = por %p107, %p108
      %p111 = scmp.ne.s32.totalorder %s96, %s110
      %p112 = scmp.eq.s32.totalorder %s23, 0
      %p113 = por %p111, %p112
      %s114 = ssub.s32 %s17, %s24
      %p115 = scmp.eq.s32.totalorder %s114, 0
      %s117 = sadd.s32 %s116, 1
      %s118 = scalar_select %p115, %s116, %s117
      %p121 = pneg %p115
      %p122 = scmp.eq.s32.totalorder %s17, 1
      %p123 = por %p121, %p122
      %p124 = scmp.ne.s32.totalorder %s116, %s119
      %p125 = scmp.eq.s32.totalorder %s17, 0
      %p126 = por %p124, %p125
      %p127 = scmp.ne.s32.totalorder %s116, %s119
      %p128 = scmp.eq.s32.totalorder %s22, 1
      %p129 = por %p127, %p128
      %p130 = scmp.ne.s32.totalorder %s119, %s120
      %p131 = scmp.eq.s32.totalorder %s22, 0
      %p132 = por %p130, %p131
      %p133 = scmp.ne.s32.totalorder %s119, %s120
      %p134 = scmp.eq.s32.totalorder %s23, 1
      %p135 = por %p133, %p134
      %p137 = scmp.ne.s32.totalorder %s120, %s136
      %p138 = scmp.eq.s32.totalorder %s23, 0
      %p139 = por %p137, %p138
      %p140 = scmp.le.s32.totalorder 1, %s17
      %p141 = scmp.lt.s32.totalorder %s17, 3
      %p142 = pnand %p140, %p141
      %p143 = pneg %p142
      // Predicated region
      $region9: #{tpu_custom_call.1} parent=5 // pred_check
        _
      $region10: #{tpu_custom_call.1} parent=5 // pred_check_branch
        %145 = sbr.rel (%p142) target = $region12
      $region11: #{tpu_custom_call.1} parent=5 // pred_region
        %s146 = ssub.s32 %s17, 1
        // Predicated region
        $region13: #{tpu_custom_call.1} parent=11 // pred_check
          %p147 = pneg %p64
        $region14: #{tpu_custom_call.1} parent=11 // pred_check_branch
          %149 = sbr.rel (%p147) target = $region16
        $region15: #{tpu_custom_call.1} parent=11 // pred_region
          %s151 = ssub.s32 3072, 3072
          %152 = vsyncadd [#allocation7], %s151
          %s153 = sshll.u32 [#allocation6], 4
          %s154 = int_to_ptr.vmem [resolvable:$true] %s153
          %159 = dma.hbm_to_vmem [thread:$0]  %s1, 3072, %s154, [#allocation7], 192, 192, 12
        $region16: #{tpu_custom_call.1} parent=11 // pred_fallthru
          _
        // Predicated region
        $region17: #{tpu_custom_call.1} parent=11 // pred_check
          %p160 = pneg %p85
        $region18: #{tpu_custom_call.1} parent=11 // pred_check_branch
          %162 = sbr.rel (%p160) target = $region20
        $region19: #{tpu_custom_call.1} parent=11 // pred_region
          %s164 = ssub.s32 1024, 1024
          %165 = vsyncadd [#allocation7], %s164
          %s166 = sshll.u32 [#allocation8], 4
          %s167 = int_to_ptr.vmem [resolvable:$true] %s166
          %172 = dma.hbm_to_vmem [thread:$0]  %s2, 1024, %s167, [#allocation7], 64, 64, 4
        $region20: #{tpu_custom_call.1} parent=11 // pred_fallthru
          _
        // Predicated region
        $region21: #{tpu_custom_call.1} parent=11 // pred_check
          %p173 = pneg %p106
        $region22: #{tpu_custom_call.1} parent=11 // pred_check_branch
          %175 = sbr.rel (%p173) target = $region24
        $region23: #{tpu_custom_call.1} parent=11 // pred_region
          _
        $region24: #{tpu_custom_call.1} parent=11 // pred_fallthru
          _
      $region12: #{tpu_custom_call.1} parent=5 // pred_fallthru
        _
      %p176 = scmp.lt.s32.totalorder %s17, 2
      // Predicated region
      $region25: #{tpu_custom_call.1} parent=5 // pred_check
        %p177 = pneg %p176
      $region26: #{tpu_custom_call.1} parent=5 // pred_check_branch
        %179 = sbr.rel (%p177) target = $region28
      $region27: #{tpu_custom_call.1} parent=5 // pred_region
        // Predicated region
        $region29: #{tpu_custom_call.1} parent=27 // pred_check
          %p180 = pneg %p37
        $region30: #{tpu_custom_call.1} parent=27 // pred_check_branch
          %182 = sbr.rel (%p180) target = $region32
        $region31: #{tpu_custom_call.1} parent=27 // pred_region
          %s183 = sand.u32 %s27, 1
          %s184 = scalar_lea.sflag [#allocation4], %s183
          %s185 = sand.u32 %s27, 1
          %s186 = smul.addr %s185, 64
          %s187 = scalar_lea.vmem [#allocation3], %s186
          %s189 = ssub.s32 1024, 1024
          %190 = vsyncadd %s184, %s189
          %s191 = smul.addr %s17, 16
          %s192 = smul.addr %s191, 64
          %s193 = scalar_lea.hbm %s0, %s192
          %s194 = sshll.u32 %s187, 4
          %s195 = int_to_ptr.vmem [resolvable:$true] %s194
          %200 = dma.hbm_to_vmem [thread:$0]  %s193, 1024, %s195, %s184, 64, 64, 4
        $region32: #{tpu_custom_call.1} parent=27 // pred_fallthru
          _
      $region28: #{tpu_custom_call.1} parent=5 // pred_fallthru
        _
      %p201 = scmp.le.s32.totalorder 1, %s17
      %p202 = scmp.lt.s32.totalorder %s17, 3
      %p203 = pnand %p201, %p202
      %p204 = pneg %p203
      // Predicated region
      $region33: #{tpu_custom_call.1} parent=5 // pred_check
        _
      $region34: #{tpu_custom_call.1} parent=5 // pred_check_branch
        %206 = sbr.rel (%p203) target = $region36
      $region35: #{tpu_custom_call.1} parent=5 // pred_region
        %s207 = ssub.s32 %s17, 1
        %s208 = sand.u32 %s30, 1
        %s209 = scalar_lea.sflag [#allocation4], %s208
        %s210 = sand.u32 %s30, 1
        %s211 = smul.addr %s210, 64
        %s212 = scalar_lea.vmem [#allocation3], %s211
        // Predicated region
        $region37: #{tpu_custom_call.1} parent=35 // pred_check
          %p213 = pneg %p43
        $region38: #{tpu_custom_call.1} parent=35 // pred_check_branch
          %215 = sbr.rel (%p213) target = $region40
        $region39: #{tpu_custom_call.1} parent=35 // pred_region
          %216 = dma.done %s209, 1024
        $region40: #{tpu_custom_call.1} parent=35 // pred_fallthru
          _
        // Predicated region
        $region41: #{tpu_custom_call.1} parent=35 // pred_check
          %p217 = pneg %p64
        $region42: #{tpu_custom_call.1} parent=35 // pred_check_branch
          %219 = sbr.rel (%p217) target = $region44
        $region43: #{tpu_custom_call.1} parent=35 // pred_region
          %220 = dma.done [#allocation7], 3072
        $region44: #{tpu_custom_call.1} parent=35 // pred_fallthru
          _
        // Predicated region
        $region45: #{tpu_custom_call.1} parent=35 // pred_check
          %p221 = pneg %p85
        $region46: #{tpu_custom_call.1} parent=35 // pred_check_branch
          %223 = sbr.rel (%p221) target = $region48
        $region47: #{tpu_custom_call.1} parent=35 // pred_region
          %224 = dma.done [#allocation7], 1024
        $region48: #{tpu_custom_call.1} parent=35 // pred_fallthru
          _
        %s225 = sand.u32 %s30, 1
        %s226 = scalar_lea.sflag [#allocation4], %s225
        %s227 = sand.u32 %s30, 1
        %s228 = smul.addr %s227, 64
        %s229 = scalar_lea.vmem [#allocation3], %s228
        %p230 = pneg %p43
        %p231 = pneg %p40
        %p232 = pneg %p64
        %p233 = pneg %p61
        %p234 = pneg %p85
        %p235 = pneg %p82
        %p236 = pneg %p106
        %p237 = pneg %p103
        %p238 = pneg %p132
        %p239 = pneg %p129
        %s240 = sand.u32 %s119, 1
        %s241 = scalar_lea.sflag [#allocation5], %s240
        %s242 = sand.u32 %s119, 1
        %s243 = smul.addr %s242, 128
        %s244 = scalar_lea.vmem [#allocation9], %s243
        %v246 = vld [vmem:[%s212] sm:$0xf]
        %v247 = vld [vmem:[%s212 + $0x4] sm:$0xf]
        %v248 = vld [vmem:[%s212 + $0x8] sm:$0xf]
        %v249 = vld [vmem:[%s212 + $0xc] sm:$0xf]
        %v250 = vld [vmem:[%s212 + $0x10] sm:$0xf]
        %v251 = vld [vmem:[%s212 + $0x14] sm:$0xf]
        %v252 = vld [vmem:[%s212 + $0x18] sm:$0xf]
        %v253 = vld [vmem:[%s212 + $0x1c] sm:$0xf]
        %v254 = vld [vmem:[%s212 + $0x20] sm:$0xf]
        %v255 = vld [vmem:[%s212 + $0x24] sm:$0xf]
        %v256 = vld [vmem:[%s212 + $0x28] sm:$0xf]
        %v257 = vld [vmem:[%s212 + $0x2c] sm:$0xf]
        %v258 = vld [vmem:[%s212 + $0x30] sm:$0xf]
        %v259 = vld [vmem:[%s212 + $0x34] sm:$0xf]
        %v260 = vld [vmem:[%s212 + $0x38] sm:$0xf]
        %v261 = vld [vmem:[%s212 + $0x3c] sm:$0xf]
        %v262 = vld [vmem:[#allocation6] sm:$0xff]
        %v263 = vld [vmem:[#allocation6 + $0x8] sm:$0xf]
        %v264 = vld [vmem:[#allocation6 + $0xc] sm:$0xff]
        %v265 = vld [vmem:[#allocation6 + $0x14] sm:$0xf]
        %v266 = vld [vmem:[#allocation6 + $0x18] sm:$0xff]
        %v267 = vld [vmem:[#allocation6 + $0x20] sm:$0xf]
        %v268 = vld [vmem:[#allocation6 + $0x24] sm:$0xff]
        %v269 = vld [vmem:[#allocation6 + $0x2c] sm:$0xf]
        %v270 = vld [vmem:[#allocation6 + $0x30] sm:$0xff]
        %v271 = vld [vmem:[#allocation6 + $0x38] sm:$0xf]
        %v272 = vld [vmem:[#allocation6 + $0x3c] sm:$0xff]
        %v273 = vld [vmem:[#allocation6 + $0x44] sm:$0xf]
        %v274 = vld [vmem:[#allocation6 + $0x48] sm:$0xff]
        %v275 = vld [vmem:[#allocation6 + $0x50] sm:$0xf]
        %v276 = vld [vmem:[#allocation6 + $0x54] sm:$0xff]
        %v277 = vld [vmem:[#allocation6 + $0x5c] sm:$0xf]
        %v278 = vld [vmem:[#allocation6 + $0x60] sm:$0xff]
        %v279 = vld [vmem:[#allocation6 + $0x68] sm:$0xf]
        %v280 = vld [vmem:[#allocation6 + $0x6c] sm:$0xff]
        %v281 = vld [vmem:[#allocation6 + $0x74] sm:$0xf]
        %v282 = vld [vmem:[#allocation6 + $0x78] sm:$0xff]
        %v283 = vld [vmem:[#allocation6 + $0x80] sm:$0xf]
        %v284 = vld [vmem:[#allocation6 + $0x84] sm:$0xff]
        %v285 = vld [vmem:[#allocation6 + $0x8c] sm:$0xf]
        %v286 = vld [vmem:[#allocation6 + $0x90] sm:$0xff]
        %v287 = vld [vmem:[#allocation6 + $0x98] sm:$0xf]
        %v288 = vld [vmem:[#allocation6 + $0x9c] sm:$0xff]
        %v289 = vld [vmem:[#allocation6 + $0xa4] sm:$0xf]
        %v290 = vld [vmem:[#allocation6 + $0xa8] sm:$0xff]
        %v291 = vld [vmem:[#allocation6 + $0xb0] sm:$0xf]
        %v292 = vld [vmem:[#allocation6 + $0xb4] sm:$0xff]
        %v293 = vld [vmem:[#allocation6 + $0xbc] sm:$0xf]
        %v310 = vunpack.c.l.b16 %v246
        %v311 = vunpack.c.l.b16 %v247
        %v312 = vunpack.c.l.b16 %v248
        %v313 = vunpack.c.l.b16 %v249
        %v314 = vunpack.c.l.b16 %v250
        %v315 = vunpack.c.l.b16 %v251
        %v316 = vunpack.c.l.b16 %v252
        %v317 = vunpack.c.l.b16 %v253
        %v318 = vunpack.c.l.b16 %v254
        %v319 = vunpack.c.l.b16 %v255
        %v320 = vunpack.c.l.b16 %v256
        %v321 = vunpack.c.l.b16 %v257
        %v322 = vunpack.c.l.b16 %v258
        %v323 = vunpack.c.l.b16 %v259
        %v324 = vunpack.c.l.b16 %v260
        %v325 = vunpack.c.l.b16 %v261
        %v326 = vpack.c.b16 %v311, %v310
        %v327 = vpack.c.b16 %v313, %v312
        %v328 = vpack.c.b16 %v315, %v314
        %v329 = vpack.c.b16 %v317, %v316
        %v330 = vpack.c.b16 %v319, %v318
        %v331 = vpack.c.b16 %v321, %v320
        %v332 = vpack.c.b16 %v323, %v322
        %v333 = vpack.c.b16 %v325, %v324
        %v374 = vunpack.c.l.b16 %v262
        %v375 = vunpack.c.h.b16 %v262
        %v376 = vunpack.c.l.b16 %v263
        %v377 = vunpack.c.l.b16 %v264
        %v378 = vunpack.c.h.b16 %v264
        %v379 = vunpack.c.l.b16 %v265
        %v380 = vunpack.c.l.b16 %v266
        %v381 = vunpack.c.h.b16 %v266
        %v382 = vunpack.c.l.b16 %v267
        %v383 = vunpack.c.l.b16 %v268
        %v384 = vunpack.c.h.b16 %v268
        %v385 = vunpack.c.l.b16 %v269
        %v386 = vunpack.c.l.b16 %v270
        %v387 = vunpack.c.h.b16 %v270
        %v388 = vunpack.c.l.b16 %v271
        %v389 = vunpack.c.l.b16 %v272
        %v390 = vunpack.c.h.b16 %v272
        %v391 = vunpack.c.l.b16 %v273
        %v392 = vunpack.c.l.b16 %v274
        %v393 = vunpack.c.h.b16 %v274
        %v394 = vunpack.c.l.b16 %v275
        %v395 = vunpack.c.l.b16 %v276
        %v396 = vunpack.c.h.b16 %v276
        %v397 = vunpack.c.l.b16 %v277
        %v398 = vunpack.c.l.b16 %v278
        %v399 = vunpack.c.h.b16 %v278
        %v400 = vunpack.c.l.b16 %v279
        %v401 = vunpack.c.l.b16 %v280
        %v402 = vunpack.c.h.b16 %v280
        %v403 = vunpack.c.l.b16 %v281
        %v404 = vunpack.c.l.b16 %v282
        %v405 = vunpack.c.h.b16 %v282
        %v406 = vunpack.c.l.b16 %v283
        %v407 = vunpack.c.l.b16 %v284
        %v408 = vunpack.c.h.b16 %v284
        %v409 = vunpack.c.l.b16 %v285
        %v410 = vunpack.c.l.b16 %v286
        %v411 = vunpack.c.h.b16 %v286
        %v412 = vunpack.c.l.b16 %v287
        %v413 = vunpack.c.l.b16 %v288
        %v414 = vunpack.c.h.b16 %v288
        %v415 = vunpack.c.l.b16 %v289
        %v416 = vunpack.c.l.b16 %v290
        %v417 = vunpack.c.h.b16 %v290
        %v418 = vunpack.c.l.b16 %v291
        %v419 = vunpack.c.l.b16 %v292
        %v420 = vunpack.c.h.b16 %v292
        %v421 = vunpack.c.l.b16 %v293
        %v422 = vpack.c.b16 %v377, %v374
        %v423 = vpack.c.b16 %v378, %v375
        %v424 = vpack.c.b16 %v379, %v376
        %v425 = vpack.c.b16 %v383, %v380
        %v426 = vpack.c.b16 %v384, %v381
        %v427 = vpack.c.b16 %v385, %v382
        %v428 = vpack.c.b16 %v389, %v386
        %v429 = vpack.c.b16 %v390, %v387
        %v430 = vpack.c.b16 %v391, %v388
        %v431 = vpack.c.b16 %v395, %v392
        %v432 = vpack.c.b16 %v396, %v393
        %v433 = vpack.c.b16 %v397, %v394
        %v434 = vpack.c.b16 %v401, %v398
        %v435 = vpack.c.b16 %v402, %v399
        %v436 = vpack.c.b16 %v403, %v400
        %v437 = vpack.c.b16 %v407, %v404
        %v438 = vpack.c.b16 %v408, %v405
        %v439 = vpack.c.b16 %v409, %v406
        %v440 = vpack.c.b16 %v413, %v410
        %v441 = vpack.c.b16 %v414, %v411
        %v442 = vpack.c.b16 %v415, %v412
        %v443 = vpack.c.b16 %v419, %v416
        %v444 = vpack.c.b16 %v420, %v417
        %v445 = vpack.c.b16 %v421, %v418
        %470 = vmatprep.subr.bf16.mxu0 %v423
        %471 = vmatpush1.bf16.msra.mxu0 %v422
        %472 = vmatprep.subr.bf16.mxu0 %v426
        %473 = vmatpush1.bf16.msra.mxu0 %v425
        %474 = vmatprep.subr.bf16.mxu0 %v429
        %475 = vmatpush1.bf16.msra.mxu0 %v428
        %476 = vmatprep.subr.bf16.mxu0 %v432
        %477 = vmatpush1.bf16.msra.mxu0 %v431
        %478 = vmatprep.subr.bf16.mxu0 %v435
        %479 = vmatpush1.bf16.msra.mxu0 %v434
        %480 = vmatprep.subr.bf16.mxu0 %v438
        %481 = vmatpush1.bf16.msra.mxu0 %v437
        %482 = vmatprep.subr.bf16.mxu0 %v441
        %483 = vmatpush1.bf16.msra.mxu0 %v440
        %484 = vmatprep.subr.bf16.mxu0 %v444
        %485 = vmatpush1.bf16.msra.mxu0 %v443
        %486 = vmatprep.subr.bf16.mxu0 0
        %487 = vmatpush1.bf16.msra.mxu0 0
        %488 = vmatprep.subr.bf16.mxu0 0
        %489 = vmatpush1.bf16.msra.mxu0 0
        %490 = vmatprep.subr.bf16.mxu0 0
        %491 = vmatpush1.bf16.msra.mxu0 0
        %492 = vmatprep.subr.bf16.mxu0 0
        %493 = vmatpush1.bf16.msra.mxu0 0
        %494 = vmatprep.subr.bf16.mxu0 0
        %495 = vmatpush1.bf16.msra.mxu0 0
        %496 = vmatprep.subr.bf16.mxu0 0
        %497 = vmatpush1.bf16.msra.mxu0 0
        %498 = vmatprep.subr.bf16.mxu0 0
        %499 = vmatpush1.bf16.msra.mxu0 0
        %500 = vmatprep.subr.bf16.mxu0 0
        %501 = vmatpush1.bf16.msra.mxu0 0
        %502 = vmatprep.mubr.bf16.mxu0 0
        %503 = vmatmul.mubr.bf16.gmra.mrb[0].mxu0 %v326
        %v504 = vpop.f32.mrb[0].mxu0
        %v505 = vadd.f32 0.0, %v504
        %v506 = vpop.f32.mrb[0].mxu0
        %v507 = vadd.f32 0.0, %v506
        %v508 = vpop.f32.mrb[0].mxu0
        %v509 = vadd.f32 0.0, %v508
        %v510 = vpop.f32.mrb[0].mxu0
        %v511 = vadd.f32 0.0, %v510
        %512 = vmatprep.mubr.bf16.mxu0 0
        %513 = vmatmul.mubr.bf16.gmra.mrb[0].mxu0 %v327
        %v514 = vpop.f32.mrb[0].mxu0
        %v515 = vadd.f32 0.0, %v514
        %v516 = vpop.f32.mrb[0].mxu0
        %v517 = vadd.f32 0.0, %v516
        %v518 = vpop.f32.mrb[0].mxu0
        %v519 = vadd.f32 0.0, %v518
        %v520 = vpop.f32.mrb[0].mxu0
        %v521 = vadd.f32 0.0, %v520
        %522 = vmatprep.mubr.bf16.mxu0 0
        %523 = vmatmul.mubr.bf16.gmra.mrb[0].mxu0 %v328
        %v524 = vpop.f32.mrb[0].mxu0
        %v525 = vadd.f32 0.0, %v524
        %v526 = vpop.f32.mrb[0].mxu0
        %v527 = vadd.f32 0.0, %v526
        %v528 = vpop.f32.mrb[0].mxu0
        %v529 = vadd.f32 0.0, %v528
        %v530 = vpop.f32.mrb[0].mxu0
        %v531 = vadd.f32 0.0, %v530
        %532 = vmatprep.mubr.bf16.mxu0 0
        %533 = vmatmul.mubr.bf16.gmra.mrb[0].mxu0 %v329
        %v534 = vpop.f32.mrb[0].mxu0
        %v535 = vadd.f32 0.0, %v534
        %v536 = vpop.f32.mrb[0].mxu0
        %v537 = vadd.f32 0.0, %v536
        %v538 = vpop.f32.mrb[0].mxu0
        %v539 = vadd.f32 0.0, %v538
        %v540 = vpop.f32.mrb[0].mxu0
        %v541 = vadd.f32 0.0, %v540
        %542 = vmatprep.mubr.bf16.mxu0 0
        %543 = vmatmul.mubr.bf16.gmra.mrb[0].mxu0 %v330
        %v544 = vpop.f32.mrb[0].mxu0
        %v545 = vadd.f32 0.0, %v544
        %v546 = vpop.f32.mrb[0].mxu0
        %v547 = vadd.f32 0.0, %v546
        %v548 = vpop.f32.mrb[0].mxu0
        %v549 = vadd.f32 0.0, %v548
        %v550 = vpop.f32.mrb[0].mxu0
        %v551 = vadd.f32 0.0, %v550
        %552 = vmatprep.mubr.bf16.mxu0 0
        %553 = vmatmul.mubr.bf16.gmra.mrb[0].mxu0 %v331
        %v554 = vpop.f32.mrb[0].mxu0
        %v555 = vadd.f32 0.0, %v554
        %v556 = vpop.f32.mrb[0].mxu0
        %v557 = vadd.f32 0.0, %v556
        %v558 = vpop.f32.mrb[0].mxu0
        %v559 = vadd.f32 0.0, %v558
        %v560 = vpop.f32.mrb[0].mxu0
        %v561 = vadd.f32 0.0, %v560
        %562 = vmatprep.mubr.bf16.mxu0 0
        %563 = vmatmul.mubr.bf16.gmra.mrb[0].mxu0 %v332
        %v564 = vpop.f32.mrb[0].mxu0
        %v565 = vadd.f32 0.0, %v564
        %v566 = vpop.f32.mrb[0].mxu0
        %v567 = vadd.f32 0.0, %v566
        %v568 = vpop.f32.mrb[0].mxu0
        %v569 = vadd.f32 0.0, %v568
        %v570 = vpop.f32.mrb[0].mxu0
        %v571 = vadd.f32 0.0, %v570
        %572 = vmatprep.mubr.bf16.mxu0 0
        %573 = vmatmul.mubr.bf16.gmra.mrb[0].mxu0 %v333
        %v574 = vpop.f32.mrb[0].mxu0
        %v575 = vadd.f32 0.0, %v574
        %v576 = vpop.f32.mrb[0].mxu0
        %v577 = vadd.f32 0.0, %v576
        %v578 = vpop.f32.mrb[0].mxu0
        %v579 = vadd.f32 0.0, %v578
        %v580 = vpop.f32.mrb[0].mxu0
        %v581 = vadd.f32 0.0, %v580
        %582 = vdwg.mxu0
        %583 = vmatprep.subr.bf16.mxu0 0
        %584 = vmatpush1.bf16.msra.mxu0 %v424
        %585 = vmatprep.subr.bf16.mxu0 0
        %586 = vmatpush1.bf16.msra.mxu0 %v427
        %587 = vmatprep.subr.bf16.mxu0 0
        %588 = vmatpush1.bf16.msra.mxu0 %v430
        %589 = vmatprep.subr.bf16.mxu0 0
        %590 = vmatpush1.bf16.msra.mxu0 %v433
        %591 = vmatprep.subr.bf16.mxu0 0
        %592 = vmatpush1.bf16.msra.mxu0 %v436
        %593 = vmatprep.subr.bf16.mxu0 0
        %594 = vmatpush1.bf16.msra.mxu0 %v439
        %595 = vmatprep.subr.bf16.mxu0 0
        %596 = vmatpush1.bf16.msra.mxu0 %v442
        %597 = vmatprep.subr.bf16.mxu0 0
        %598 = vmatpush1.bf16.msra.mxu0 %v445
        %599 = vmatprep.subr.bf16.mxu0 0
        %600 = vmatpush1.bf16.msra.mxu0 0
        %601 = vmatprep.subr.bf16.mxu0 0
        %602 = vmatpush1.bf16.msra.mxu0 0
        %603 = vmatprep.subr.bf16.mxu0 0
        %604 = vmatpush1.bf16.msra.mxu0 0
        %605 = vmatprep.subr.bf16.mxu0 0
        %606 = vmatpush1.bf16.msra.mxu0 0
        %607 = vmatprep.subr.bf16.mxu0 0
        %608 = vmatpush1.bf16.msra.mxu0 0
        %609 = vmatprep.subr.bf16.mxu0 0
        %610 = vmatpush1.bf16.msra.mxu0 0
        %611 = vmatprep.subr.bf16.mxu0 0
        %612 = vmatpush1.bf16.msra.mxu0 0
        %613 = vmatprep.subr.bf16.mxu0 0
        %614 = vmatpush1.bf16.msra.mxu0 0
        %615 = vmatprep.mubr.bf16.mxu0 0
        %616 = vmatmul.mubr.bf16.gmra.mrb[0].mxu0 %v326
        %v617 = vpop.f32.mrb[0].mxu0
        %v618 = vadd.f32 0.0, %v617
        %v619 = vpop.f32.mrb[0].mxu0
        %v620 = vpop.f32.mrb[0].mxu0
        %v621 = vadd.f32 0.0, %v620
        %v622 = vpop.f32.mrb[0].mxu0
        %623 = vmatprep.mubr.bf16.mxu0 0
        %624 = vmatmul.mubr.bf16.gmra.mrb[0].mxu0 %v327
        %v625 = vpop.f32.mrb[0].mxu0
        %v626 = vadd.f32 0.0, %v625
        %v627 = vpop.f32.mrb[0].mxu0
        %v628 = vpop.f32.mrb[0].mxu0
        %v629 = vadd.f32 0.0, %v628
        %v630 = vpop.f32.mrb[0].mxu0
        %631 = vmatprep.mubr.bf16.mxu0 0
        %632 = vmatmul.mubr.bf16.gmra.mrb[0].mxu0 %v328
        %v633 = vpop.f32.mrb[0].mxu0
        %v634 = vadd.f32 0.0, %v633
        %v635 = vpop.f32.mrb[0].mxu0
        %v636 = vpop.f32.mrb[0].mxu0
        %v637 = vadd.f32 0.0, %v636
        %v638 = vpop.f32.mrb[0].mxu0
        %639 = vmatprep.mubr.bf16.mxu0 0
        %640 = vmatmul.mubr.bf16.gmra.mrb[0].mxu0 %v329
        %v641 = vpop.f32.mrb[0].mxu0
        %v642 = vadd.f32 0.0, %v641
        %v643 = vpop.f32.mrb[0].mxu0
        %v644 = vpop.f32.mrb[0].mxu0
        %v645 = vadd.f32 0.0, %v644
        %v646 = vpop.f32.mrb[0].mxu0
        %647 = vmatprep.mubr.bf16.mxu0 0
        %648 = vmatmul.mubr.bf16.gmra.mrb[0].mxu0 %v330
        %v649 = vpop.f32.mrb[0].mxu0
        %v650 = vadd.f32 0.0, %v649
        %v651 = vpop.f32.mrb[0].mxu0
        %v652 = vpop.f32.mrb[0].mxu0
        %v653 = vadd.f32 0.0, %v652
        %v654 = vpop.f32.mrb[0].mxu0
        %655 = vmatprep.mubr.bf16.mxu0 0
        %656 = vmatmul.mubr.bf16.gmra.mrb[0].mxu0 %v331
        %v657 = vpop.f32.mrb[0].mxu0
        %v658 = vadd.f32 0.0, %v657
        %v659 = vpop.f32.mrb[0].mxu0
        %v660 = vpop.f32.mrb[0].mxu0
        %v661 = vadd.f32 0.0, %v660
        %v662 = vpop.f32.mrb[0].mxu0
        %663 = vmatprep.mubr.bf16.mxu0 0
        %664 = vmatmul.mubr.bf16.gmra.mrb[0].mxu0 %v332
        %v665 = vpop.f32.mrb[0].mxu0
        %v666 = vadd.f32 0.0, %v665
        %v667 = vpop.f32.mrb[0].mxu0
        %v668 = vpop.f32.mrb[0].mxu0
        %v669 = vadd.f32 0.0, %v668
        %v670 = vpop.f32.mrb[0].mxu0
        %671 = vmatprep.mubr.bf16.mxu0 0
        %672 = vmatmul.mubr.bf16.gmra.mrb[0].mxu0 %v333
        %v673 = vpop.f32.mrb[0].mxu0
        %v674 = vadd.f32 0.0, %v673
        %v675 = vpop.f32.mrb[0].mxu0
        %v676 = vpop.f32.mrb[0].mxu0
        %v677 = vadd.f32 0.0, %v676
        %v678 = vpop.f32.mrb[0].mxu0
        %679 = vdwg.mxu0
        %v680 = vpack.c.bf16 %v509, %v505
        %v681 = vpack.c.bf16 %v511, %v507
        %v682 = vpack.c.bf16 %v621, %v618
        %v683 = vpack.c.bf16 %v519, %v515
        %v684 = vpack.c.bf16 %v521, %v517
        %v685 = vpack.c.bf16 %v629, %v626
        %v686 = vpack.c.bf16 %v529, %v525
        %v687 = vpack.c.bf16 %v531, %v527
        %v688 = vpack.c.bf16 %v637, %v634
        %v689 = vpack.c.bf16 %v539, %v535
        %v690 = vpack.c.bf16 %v541, %v537
        %v691 = vpack.c.bf16 %v645, %v642
        %v692 = vpack.c.bf16 %v549, %v545
        %v693 = vpack.c.bf16 %v551, %v547
        %v694 = vpack.c.bf16 %v653, %v650
        %v695 = vpack.c.bf16 %v559, %v555
        %v696 = vpack.c.bf16 %v561, %v557
        %v697 = vpack.c.bf16 %v661, %v658
        %v698 = vpack.c.bf16 %v569, %v565
        %v699 = vpack.c.bf16 %v571, %v567
        %v700 = vpack.c.bf16 %v669, %v666
        %v701 = vpack.c.bf16 %v579, %v575
        %v702 = vpack.c.bf16 %v581, %v577
        %v703 = vpack.c.bf16 %v677, %v674
        %v704 = vlaneseq
        %v705 = vand.u32 %v704, 127
        %vm706 = vcmp.lt.s32.totalorder %v705, 16
        %v707 = vsel %vm706, 0.0, -1e+30
        %vm708 = vcmask 261120
        %v710 = vsel %vm708, %v680, 0
        %v713 = vsel %vm708, %v683, 0
        %v716 = vsel %vm708, %v686, 0
        %v719 = vsel %vm708, %v689, 0
        %v722 = vsel %vm708, %v692, 0
        %v725 = vsel %vm708, %v695, 0
        %v728 = vsel %vm708, %v698, 0
        %v731 = vsel %vm708, %v701, 0
        %v734 = vsel %vm708, %v681, 0
        %v737 = vsel %vm708, %v684, 0
        %v740 = vsel %vm708, %v687, 0
        %v743 = vsel %vm708, %v690, 0
        %v746 = vsel %vm708, %v693, 0
        %v749 = vsel %vm708, %v696, 0
        %v752 = vsel %vm708, %v699, 0
        %v755 = vsel %vm708, %v702, 0
        %757 = vmatprep.subr.bf16.mxu0 0
        %758 = vmatpush1.bf16.xpose.msra.mxu0 %v734
        %759 = vmatprep.subr.bf16.mxu0 0
        %760 = vmatpush1.bf16.xpose.msra.mxu0 %v737
        %761 = vmatprep.subr.bf16.mxu0 0
        %762 = vmatpush1.bf16.xpose.msra.mxu0 %v740
        %763 = vmatprep.subr.bf16.mxu0 0
        %764 = vmatpush1.bf16.xpose.msra.mxu0 %v743
        %765 = vmatprep.subr.bf16.mxu0 0
        %766 = vmatpush1.bf16.xpose.msra.mxu0 %v746
        %767 = vmatprep.subr.bf16.mxu0 0
        %768 = vmatpush1.bf16.xpose.msra.mxu0 %v749
        %769 = vmatprep.subr.bf16.mxu0 0
        %770 = vmatpush1.bf16.xpose.msra.mxu0 %v752
        %771 = vmatprep.subr.bf16.mxu0 0
        %772 = vmatpush1.bf16.xpose.msra.mxu0 %v755
        %773 = vmatprep.subr.bf16.mxu0 0
        %774 = vmatpush1.bf16.xpose.msra.mxu0 0
        %775 = vmatprep.subr.bf16.mxu0 0
        %776 = vmatpush1.bf16.xpose.msra.mxu0 0
        %777 = vmatprep.subr.bf16.mxu0 0
        %778 = vmatpush1.bf16.xpose.msra.mxu0 0
        %779 = vmatprep.subr.bf16.mxu0 0
        %780 = vmatpush1.bf16.xpose.msra.mxu0 0
        %781 = vmatprep.subr.bf16.mxu0 0
        %782 = vmatpush1.bf16.xpose.msra.mxu0 0
        %783 = vmatprep.subr.bf16.mxu0 0
        %784 = vmatpush1.bf16.xpose.msra.mxu0 0
        %785 = vmatprep.subr.bf16.mxu0 0
        %786 = vmatpush1.bf16.xpose.msra.mxu0 0
        %787 = vmatprep.subr.bf16.mxu0 0
        %788 = vmatpush1.bf16.xpose.msra.mxu0 0
        %789 = vmatprep.mubr.bf16.mxu0 0
        %790 = vmatmul.mubr.bf16.gmra.mrb[0].mxu0 %v710
        %v791 = vpop.f32.mrb[0].mxu0
        %v792 = vadd.f32 %v707, %v791
        %v793 = vpop.f32.mrb[0].mxu0
        %v794 = vpop.f32.mrb[0].mxu0
        %v795 = vadd.f32 %v707, %v794
        %v796 = vpop.f32.mrb[0].mxu0
        %797 = vmatprep.mubr.bf16.mxu0 0
        %798 = vmatmul.mubr.bf16.gmra.mrb[0].mxu0 %v713
        %v799 = vpop.f32.mrb[0].mxu0
        %v800 = vadd.f32 %v707, %v799
        %v801 = vpop.f32.mrb[0].mxu0
        %v802 = vpop.f32.mrb[0].mxu0
        %v803 = vadd.f32 %v707, %v802
        %v804 = vpop.f32.mrb[0].mxu0
        %805 = vmatprep.mubr.bf16.mxu0 0
        %806 = vmatmul.mubr.bf16.gmra.mrb[0].mxu0 %v716
        %v807 = vpop.f32.mrb[0].mxu0
        %v808 = vadd.f32 %v707, %v807
        %v809 = vpop.f32.mrb[0].mxu0
        %v810 = vpop.f32.mrb[0].mxu0
        %v811 = vadd.f32 %v707, %v810
        %v812 = vpop.f32.mrb[0].mxu0
        %813 = vmatprep.mubr.bf16.mxu0 0
        %814 = vmatmul.mubr.bf16.gmra.mrb[0].mxu0 %v719
        %v815 = vpop.f32.mrb[0].mxu0
        %v816 = vadd.f32 %v707, %v815
        %v817 = vpop.f32.mrb[0].mxu0
        %v818 = vpop.f32.mrb[0].mxu0
        %v819 = vadd.f32 %v707, %v818
        %v820 = vpop.f32.mrb[0].mxu0
        %821 = vmatprep.mubr.bf16.mxu0 0
        %822 = vmatmul.mubr.bf16.gmra.mrb[0].mxu0 %v722
        %v823 = vpop.f32.mrb[0].mxu0
        %v824 = vadd.f32 %v707, %v823
        %v825 = vpop.f32.mrb[0].mxu0
        %v826 = vpop.f32.mrb[0].mxu0
        %v827 = vadd.f32 %v707, %v826
        %v828 = vpop.f32.mrb[0].mxu0
        %829 = vmatprep.mubr.bf16.mxu0 0
        %830 = vmatmul.mubr.bf16.gmra.mrb[0].mxu0 %v725
        %v831 = vpop.f32.mrb[0].mxu0
        %v832 = vadd.f32 %v707, %v831
        %v833 = vpop.f32.mrb[0].mxu0
        %v834 = vpop.f32.mrb[0].mxu0
        %v835 = vadd.f32 %v707, %v834
        %v836 = vpop.f32.mrb[0].mxu0
        %837 = vmatprep.mubr.bf16.mxu0 0
        %838 = vmatmul.mubr.bf16.gmra.mrb[0].mxu0 %v728
        %v839 = vpop.f32.mrb[0].mxu0
        %v840 = vadd.f32 %v707, %v839
        %v841 = vpop.f32.mrb[0].mxu0
        %v842 = vpop.f32.mrb[0].mxu0
        %v843 = vadd.f32 %v707, %v842
        %v844 = vpop.f32.mrb[0].mxu0
        %845 = vmatprep.mubr.bf16.mxu0 0
        %846 = vmatmul.mubr.bf16.gmra.mrb[0].mxu0 %v731
        %v847 = vpop.f32.mrb[0].mxu0
        %v848 = vadd.f32 %v707, %v847
        %v849 = vpop.f32.mrb[0].mxu0
        %v850 = vpop.f32.mrb[0].mxu0
        %v851 = vadd.f32 %v707, %v850
        %v852 = vpop.f32.mrb[0].mxu0
        %853 = vdwg.mxu0
        %854 = vmax.xlane.f32.xlu0 %v792
        %v855 = vpop.xlane.xlu0 %854
        %856 = vmax.xlane.f32.xlu0 %v795
        %v857 = vpop.xlane.xlu0 %856
        %858 = vmax.xlane.f32.xlu0 %v800
        %v859 = vpop.xlane.xlu0 %858
        %860 = vmax.xlane.f32.xlu0 %v803
        %v861 = vpop.xlane.xlu0 %860
        %862 = vmax.xlane.f32.xlu0 %v808
        %v863 = vpop.xlane.xlu0 %862
        %864 = vmax.xlane.f32.xlu0 %v811
        %v865 = vpop.xlane.xlu0 %864
        %866 = vmax.xlane.f32.xlu0 %v816
        %v867 = vpop.xlane.xlu0 %866
        %868 = vmax.xlane.f32.xlu0 %v819
        %v869 = vpop.xlane.xlu0 %868
        %870 = vmax.xlane.f32.xlu0 %v824
        %v871 = vpop.xlane.xlu0 %870
        %872 = vmax.xlane.f32.xlu0 %v827
        %v873 = vpop.xlane.xlu0 %872
        %874 = vmax.xlane.f32.xlu0 %v832
        %v875 = vpop.xlane.xlu0 %874
        %876 = vmax.xlane.f32.xlu0 %v835
        %v877 = vpop.xlane.xlu0 %876
        %878 = vmax.xlane.f32.xlu0 %v840
        %v879 = vpop.xlane.xlu0 %878
        %880 = vmax.xlane.f32.xlu0 %v843
        %v881 = vpop.xlane.xlu0 %880
        %882 = vmax.xlane.f32.xlu0 %v848
        %v883 = vpop.xlane.xlu0 %882
        %884 = vmax.xlane.f32.xlu0 %v851
        %v885 = vpop.xlane.xlu0 %884
        %v886 = vsub.f32 %v792, %v855
        %v887 = vsub.f32 %v795, %v857
        %v888 = vsub.f32 %v800, %v859
        %v889 = vsub.f32 %v803, %v861
        %v890 = vsub.f32 %v808, %v863
        %v891 = vsub.f32 %v811, %v865
        %v892 = vsub.f32 %v816, %v867
        %v893 = vsub.f32 %v819, %v869
        %v894 = vsub.f32 %v824, %v871
        %v895 = vsub.f32 %v827, %v873
        %v896 = vsub.f32 %v832, %v875
        %v897 = vsub.f32 %v835, %v877
        %v898 = vsub.f32 %v840, %v879
        %v899 = vsub.f32 %v843, %v881
        %v900 = vsub.f32 %v848, %v883
        %v901 = vsub.f32 %v851, %v885
        %v902 = vmul.f32 %v886, 1.442695
        %v903 = vpow.pop %v902
        %v904 = vmul.f32 %v887, 1.442695
        %v905 = vpow.pop %v904
        %v906 = vmul.f32 %v888, 1.442695
        %v907 = vpow.pop %v906
        %v908 = vmul.f32 %v889, 1.442695
        %v909 = vpow.pop %v908
        %v910 = vmul.f32 %v890, 1.442695
        %v911 = vpow.pop %v910
        %v912 = vmul.f32 %v891, 1.442695
        %v913 = vpow.pop %v912
        %v914 = vmul.f32 %v892, 1.442695
        %v915 = vpow.pop %v914
        %v916 = vmul.f32 %v893, 1.442695
        %v917 = vpow.pop %v916
        %v918 = vmul.f32 %v894, 1.442695
        %v919 = vpow.pop %v918
        %v920 = vmul.f32 %v895, 1.442695
        %v921 = vpow.pop %v920
        %v922 = vmul.f32 %v896, 1.442695
        %v923 = vpow.pop %v922
        %v924 = vmul.f32 %v897, 1.442695
        %v925 = vpow.pop %v924
        %v926 = vmul.f32 %v898, 1.442695
        %v927 = vpow.pop %v926
        %v928 = vmul.f32 %v899, 1.442695
        %v929 = vpow.pop %v928
        %v930 = vmul.f32 %v900, 1.442695
        %v931 = vpow.pop %v930
        %v932 = vmul.f32 %v901, 1.442695
        %v933 = vpow.pop %v932
        %934 = vadd.xlane.f32.xlu0 %v903
        %v935 = vpop.xlane.xlu0 %934
        %936 = vadd.xlane.f32.xlu0 %v905
        %v937 = vpop.xlane.xlu0 %936
        %938 = vadd.xlane.f32.xlu0 %v907
        %v939 = vpop.xlane.xlu0 %938
        %940 = vadd.xlane.f32.xlu0 %v909
        %v941 = vpop.xlane.xlu0 %940
        %942 = vadd.xlane.f32.xlu0 %v911
        %v943 = vpop.xlane.xlu0 %942
        %944 = vadd.xlane.f32.xlu0 %v913
        %v945 = vpop.xlane.xlu0 %944
        %946 = vadd.xlane.f32.xlu0 %v915
        %v947 = vpop.xlane.xlu0 %946
        %948 = vadd.xlane.f32.xlu0 %v917
        %v949 = vpop.xlane.xlu0 %948
        %950 = vadd.xlane.f32.xlu0 %v919
        %v951 = vpop.xlane.xlu0 %950
        %952 = vadd.xlane.f32.xlu0 %v921
        %v953 = vpop.xlane.xlu0 %952
        %954 = vadd.xlane.f32.xlu0 %v923
        %v955 = vpop.xlane.xlu0 %954
        %956 = vadd.xlane.f32.xlu0 %v925
        %v957 = vpop.xlane.xlu0 %956
        %958 = vadd.xlane.f32.xlu0 %v927
        %v959 = vpop.xlane.xlu0 %958
        %960 = vadd.xlane.f32.xlu0 %v929
        %v961 = vpop.xlane.xlu0 %960
        %962 = vadd.xlane.f32.xlu0 %v931
        %v963 = vpop.xlane.xlu0 %962
        %964 = vadd.xlane.f32.xlu0 %v933
        %v965 = vpop.xlane.xlu0 %964
        %v966 = vrcp.pop %v935
        %v967 = vrcp.pop %v937
        %v968 = vrcp.pop %v939
        %v969 = vrcp.pop %v941
        %v970 = vrcp.pop %v943
        %v971 = vrcp.pop %v945
        %v972 = vrcp.pop %v947
        %v973 = vrcp.pop %v949
        %v974 = vrcp.pop %v951
        %v975 = vrcp.pop %v953
        %v976 = vrcp.pop %v955
        %v977 = vrcp.pop %v957
        %v978 = vrcp.pop %v959
        %v979 = vrcp.pop %v961
        %v980 = vrcp.pop %v963
        %v981 = vrcp.pop %v965
        %v982 = vmul.f32 %v903, %v966
        %v983 = vmul.f32 %v905, %v967
        %v984 = vmul.f32 %v907, %v968
        %v985 = vmul.f32 %v909, %v969
        %v986 = vmul.f32 %v911, %v970
        %v987 = vmul.f32 %v913, %v971
        %v988 = vmul.f32 %v915, %v972
        %v989 = vmul.f32 %v917, %v973
        %v990 = vmul.f32 %v919, %v974
        %v991 = vmul.f32 %v921, %v975
        %v992 = vmul.f32 %v923, %v976
        %v993 = vmul.f32 %v925, %v977
        %v994 = vmul.f32 %v927, %v978
        %v995 = vmul.f32 %v929, %v979
        %v996 = vmul.f32 %v931, %v980
        %v997 = vmul.f32 %v933, %v981
        %v998 = vpack.c.bf16 %v983, %v982
        %v999 = vpack.c.bf16 %v985, %v984
        %v1000 = vpack.c.bf16 %v987, %v986
        %v1001 = vpack.c.bf16 %v989, %v988
        %v1002 = vpack.c.bf16 %v991, %v990
        %v1003 = vpack.c.bf16 %v993, %v992
        %v1004 = vpack.c.bf16 %v995, %v994
        %v1005 = vpack.c.bf16 %v997, %v996
        %1006 = vmatprep.subr.bf16.mxu0 0
        %1007 = vmatpush1.bf16.msra.mxu0 %v682
        %1008 = vmatprep.subr.bf16.mxu0 0
        %1009 = vmatpush1.bf16.msra.mxu0 %v685
        %1010 = vmatprep.subr.bf16.mxu0 0
        %1011 = vmatpush1.bf16.msra.mxu0 %v688
        %1012 = vmatprep.subr.bf16.mxu0 0
        %1013 = vmatpush1.bf16.msra.mxu0 %v691
        %1014 = vmatprep.subr.bf16.mxu0 0
        %1015 = vmatpush1.bf16.msra.mxu0 %v694
        %1016 = vmatprep.subr.bf16.mxu0 0
        %1017 = vmatpush1.bf16.msra.mxu0 %v697
        %1018 = vmatprep.subr.bf16.mxu0 0
        %1019 = vmatpush1.bf16.msra.mxu0 %v700
        %1020 = vmatprep.subr.bf16.mxu0 0
        %1021 = vmatpush1.bf16.msra.mxu0 %v703
        %1022 = vmatprep.subr.bf16.mxu0 0
        %1023 = vmatpush1.bf16.msra.mxu0 0
        %1024 = vmatprep.subr.bf16.mxu0 0
        %1025 = vmatpush1.bf16.msra.mxu0 0
        %1026 = vmatprep.subr.bf16.mxu0 0
        %1027 = vmatpush1.bf16.msra.mxu0 0
        %1028 = vmatprep.subr.bf16.mxu0 0
        %1029 = vmatpush1.bf16.msra.mxu0 0
        %1030 = vmatprep.subr.bf16.mxu0 0
        %1031 = vmatpush1.bf16.msra.mxu0 0
        %1032 = vmatprep.subr.bf16.mxu0 0
        %1033 = vmatpush1.bf16.msra.mxu0 0
        %1034 = vmatprep.subr.bf16.mxu0 0
        %1035 = vmatpush1.bf16.msra.mxu0 0
        %1036 = vmatprep.subr.bf16.mxu0 0
        %1037 = vmatpush1.bf16.msra.mxu0 0
        %1038 = vmatprep.mubr.bf16.mxu0 0
        %1039 = vmatmul.mubr.bf16.gmra.mrb[0].mxu0 %v998
        %v1040 = vpop.f32.mrb[0].mxu0
        %v1041 = vadd.f32 0.0, %v1040
        %v1042 = vpop.f32.mrb[0].mxu0
        %v1043 = vpop.f32.mrb[0].mxu0
        %v1044 = vadd.f32 0.0, %v1043
        %v1045 = vpop.f32.mrb[0].mxu0
        %1046 = vmatprep.mubr.bf16.mxu0 0
        %1047 = vmatmul.mubr.bf16.gmra.mrb[0].mxu0 %v999
        %v1048 = vpop.f32.mrb[0].mxu0
        %v1049 = vadd.f32 0.0, %v1048
        %v1050 = vpop.f32.mrb[0].mxu0
        %v1051 = vpop.f32.mrb[0].mxu0
        %v1052 = vadd.f32 0.0, %v1051
        %v1053 = vpop.f32.mrb[0].mxu0
        %1054 = vmatprep.mubr.bf16.mxu0 0
        %1055 = vmatmul.mubr.bf16.gmra.mrb[0].mxu0 %v1000
        %v1056 = vpop.f32.mrb[0].mxu0
        %v1057 = vadd.f32 0.0, %v1056
        %v1058 = vpop.f32.mrb[0].mxu0
        %v1059 = vpop.f32.mrb[0].mxu0
        %v1060 = vadd.f32 0.0, %v1059
        %v1061 = vpop.f32.mrb[0].mxu0
        %1062 = vmatprep.mubr.bf16.mxu0 0
        %1063 = vmatmul.mubr.bf16.gmra.mrb[0].mxu0 %v1001
        %v1064 = vpop.f32.mrb[0].mxu0
        %v1065 = vadd.f32 0.0, %v1064
        %v1066 = vpop.f32.mrb[0].mxu0
        %v1067 = vpop.f32.mrb[0].mxu0
        %v1068 = vadd.f32 0.0, %v1067
        %v1069 = vpop.f32.mrb[0].mxu0
        %1070 = vmatprep.mubr.bf16.mxu0 0
        %1071 = vmatmul.mubr.bf16.gmra.mrb[0].mxu0 %v1002
        %v1072 = vpop.f32.mrb[0].mxu0
        %v1073 = vadd.f32 0.0, %v1072
        %v1074 = vpop.f32.mrb[0].mxu0
        %v1075 = vpop.f32.mrb[0].mxu0
        %v1076 = vadd.f32 0.0, %v1075
        %v1077 = vpop.f32.mrb[0].mxu0
        %1078 = vmatprep.mubr.bf16.mxu0 0
        %1079 = vmatmul.mubr.bf16.gmra.mrb[0].mxu0 %v1003
        %v1080 = vpop.f32.mrb[0].mxu0
        %v1081 = vadd.f32 0.0, %v1080
        %v1082 = vpop.f32.mrb[0].mxu0
        %v1083 = vpop.f32.mrb[0].mxu0
        %v1084 = vadd.f32 0.0, %v1083
        %v1085 = vpop.f32.mrb[0].mxu0
        %1086 = vmatprep.mubr.bf16.mxu0 0
        %1087 = vmatmul.mubr.bf16.gmra.mrb[0].mxu0 %v1004
        %v1088 = vpop.f32.mrb[0].mxu0
        %v1089 = vadd.f32 0.0, %v1088
        %v1090 = vpop.f32.mrb[0].mxu0
        %v1091 = vpop.f32.mrb[0].mxu0
        %v1092 = vadd.f32 0.0, %v1091
        %v1093 = vpop.f32.mrb[0].mxu0
        %1094 = vmatprep.mubr.bf16.mxu0 0
        %1095 = vmatmul.mubr.bf16.gmra.mrb[0].mxu0 %v1005
        %v1096 = vpop.f32.mrb[0].mxu0
        %v1097 = vadd.f32 0.0, %v1096
        %v1098 = vpop.f32.mrb[0].mxu0
        %v1099 = vpop.f32.mrb[0].mxu0
        %v1100 = vadd.f32 0.0, %v1099
        %v1101 = vpop.f32.mrb[0].mxu0
        %1102 = vdwg.mxu0
        %v1103 = vpack.c.bf16 %v1044, %v1041
        %v1104 = vpack.c.bf16 %v1052, %v1049
        %v1105 = vpack.c.bf16 %v1060, %v1057
        %v1106 = vpack.c.bf16 %v1068, %v1065
        %v1107 = vpack.c.bf16 %v1076, %v1073
        %v1108 = vpack.c.bf16 %v1084, %v1081
        %v1109 = vpack.c.bf16 %v1092, %v1089
        %v1110 = vpack.c.bf16 %v1100, %v1097
        %1111 = vst.msk [vmem:[#allocation2] sm:$0xff] %vm708, %v1103
        %1112 = vst.msk [vmem:[#allocation2 + $0x8] sm:$0xff] %vm708, %v1104
        %1113 = vst.msk [vmem:[#allocation2 + $0x10] sm:$0xff] %vm708, %v1105
        %1114 = vst.msk [vmem:[#allocation2 + $0x18] sm:$0xff] %vm708, %v1106
        %1115 = vst.msk [vmem:[#allocation2 + $0x20] sm:$0xff] %vm708, %v1107
        %1116 = vst.msk [vmem:[#allocation2 + $0x28] sm:$0xff] %vm708, %v1108
        %1117 = vst.msk [vmem:[#allocation2 + $0x30] sm:$0xff] %vm708, %v1109
        %1118 = vst.msk [vmem:[#allocation2 + $0x38] sm:$0xff] %vm708, %v1110
        %1127 = vrot.lane.b32.xlu0 %v680, 96
        %v1128 = vpop.permute.xlu0 %1127
        %1129 = vrot.lane.b32.xlu0 %v683, 96
        %v1130 = vpop.permute.xlu0 %1129
        %1131 = vrot.lane.b32.xlu0 %v686, 96
        %v1132 = vpop.permute.xlu0 %1131
        %1133 = vrot.lane.b32.xlu0 %v689, 96
        %v1134 = vpop.permute.xlu0 %1133
        %1135 = vrot.lane.b32.xlu0 %v692, 96
        %v1136 = vpop.permute.xlu0 %1135
        %1137 = vrot.lane.b32.xlu0 %v695, 96
        %v1138 = vpop.permute.xlu0 %1137
        %1139 = vrot.lane.b32.xlu0 %v698, 96
        %v1140 = vpop.permute.xlu0 %1139
        %1141 = vrot.lane.b32.xlu0 %v701, 96
        %v1142 = vpop.permute.xlu0 %1141
        %1151 = vrot.lane.b32.xlu0 %v681, 96
        %v1152 = vpop.permute.xlu0 %1151
        %1153 = vrot.lane.b32.xlu0 %v684, 96
        %v1154 = vpop.permute.xlu0 %1153
        %1155 = vrot.lane.b32.xlu0 %v687, 96
        %v1156 = vpop.permute.xlu0 %1155
        %1157 = vrot.lane.b32.xlu0 %v690, 96
        %v1158 = vpop.permute.xlu0 %1157
        %1159 = vrot.lane.b32.xlu0 %v693, 96
        %v1160 = vpop.permute.xlu0 %1159
        %1161 = vrot.lane.b32.xlu0 %v696, 96
        %v1162 = vpop.permute.xlu0 %1161
        %1163 = vrot.lane.b32.xlu0 %v699, 96
        %v1164 = vpop.permute.xlu0 %1163
        %1165 = vrot.lane.b32.xlu0 %v702, 96
        %v1166 = vpop.permute.xlu0 %1165
        %v1168 = vsel %vm708, %v1128, 0
        %v1171 = vsel %vm708, %v1130, 0
        %v1174 = vsel %vm708, %v1132, 0
        %v1177 = vsel %vm708, %v1134, 0
        %v1180 = vsel %vm708, %v1136, 0
        %v1183 = vsel %vm708, %v1138, 0
        %v1186 = vsel %vm708, %v1140, 0
        %v1189 = vsel %vm708, %v1142, 0
        %v1192 = vsel %vm708, %v1152, 0
        %v1195 = vsel %vm708, %v1154, 0
        %v1198 = vsel %vm708, %v1156, 0
        %v1201 = vsel %vm708, %v1158, 0
        %v1204 = vsel %vm708, %v1160, 0
        %v1207 = vsel %vm708, %v1162, 0
        %v1210 = vsel %vm708, %v1164, 0
        %v1213 = vsel %vm708, %v1166, 0
        %1215 = vmatprep.subr.bf16.mxu0 0
        %1216 = vmatpush1.bf16.xpose.msra.mxu0 %v1192
        %1217 = vmatprep.subr.bf16.mxu0 0
        %1218 = vmatpush1.bf16.xpose.msra.mxu0 %v1195
        %1219 = vmatprep.subr.bf16.mxu0 0
        %1220 = vmatpush1.bf16.xpose.msra.mxu0 %v1198
        %1221 = vmatprep.subr.bf16.mxu0 0
        %1222 = vmatpush1.bf16.xpose.msra.mxu0 %v1201
        %1223 = vmatprep.subr.bf16.mxu0 0
        %1224 = vmatpush1.bf16.xpose.msra.mxu0 %v1204
        %1225 = vmatprep.subr.bf16.mxu0 0
        %1226 = vmatpush1.bf16.xpose.msra.mxu0 %v1207
        %1227 = vmatprep.subr.bf16.mxu0 0
        %1228 = vmatpush1.bf16.xpose.msra.mxu0 %v1210
        %1229 = vmatprep.subr.bf16.mxu0 0
        %1230 = vmatpush1.bf16.xpose.msra.mxu0 %v1213
        %1231 = vmatprep.subr.bf16.mxu0 0
        %1232 = vmatpush1.bf16.xpose.msra.mxu0 0
        %1233 = vmatprep.subr.bf16.mxu0 0
        %1234 = vmatpush1.bf16.xpose.msra.mxu0 0
        %1235 = vmatprep.subr.bf16.mxu0 0
        %1236 = vmatpush1.bf16.xpose.msra.mxu0 0
        %1237 = vmatprep.subr.bf16.mxu0 0
        %1238 = vmatpush1.bf16.xpose.msra.mxu0 0
        %1239 = vmatprep.subr.bf16.mxu0 0
        %1240 = vmatpush1.bf16.xpose.msra.mxu0 0
        %1241 = vmatprep.subr.bf16.mxu0 0
        %1242 = vmatpush1.bf16.xpose.msra.mxu0 0
        %1243 = vmatprep.subr.bf16.mxu0 0
        %1244 = vmatpush1.bf16.xpose.msra.mxu0 0
        %1245 = vmatprep.subr.bf16.mxu0 0
        %1246 = vmatpush1.bf16.xpose.msra.mxu0 0
        %1247 = vmatprep.mubr.bf16.mxu0 0
        %1248 = vmatmul.mubr.bf16.gmra.mrb[0].mxu0 %v1168
        %v1249 = vpop.f32.mrb[0].mxu0
        %v1250 = vadd.f32 %v707, %v1249
        %v1251 = vpop.f32.mrb[0].mxu0
        %v1252 = vpop.f32.mrb[0].mxu0
        %v1253 = vadd.f32 %v707, %v1252
        %v1254 = vpop.f32.mrb[0].mxu0
        %1255 = vmatprep.mubr.bf16.mxu0 0
        %1256 = vmatmul.mubr.bf16.gmra.mrb[0].mxu0 %v1171
        %v1257 = vpop.f32.mrb[0].mxu0
        %v1258 = vadd.f32 %v707, %v1257
        %v1259 = vpop.f32.mrb[0].mxu0
        %v1260 = vpop.f32.mrb[0].mxu0
        %v1261 = vadd.f32 %v707, %v1260
        %v1262 = vpop.f32.mrb[0].mxu0
        %1263 = vmatprep.mubr.bf16.mxu0 0
        %1264 = vmatmul.mubr.bf16.gmra.mrb[0].mxu0 %v1174
        %v1265 = vpop.f32.mrb[0].mxu0
        %v1266 = vadd.f32 %v707, %v1265
        %v1267 = vpop.f32.mrb[0].mxu0
        %v1268 = vpop.f32.mrb[0].mxu0
        %v1269 = vadd.f32 %v707, %v1268
        %v1270 = vpop.f32.mrb[0].mxu0
        %1271 = vmatprep.mubr.bf16.mxu0 0
        %1272 = vmatmul.mubr.bf16.gmra.mrb[0].mxu0 %v1177
        %v1273 = vpop.f32.mrb[0].mxu0
        %v1274 = vadd.f32 %v707, %v1273
        %v1275 = vpop.f32.mrb[0].mxu0
        %v1276 = vpop.f32.mrb[0].mxu0
        %v1277 = vadd.f32 %v707, %v1276
        %v1278 = vpop.f32.mrb[0].mxu0
        %1279 = vmatprep.mubr.bf16.mxu0 0
        %1280 = vmatmul.mubr.bf16.gmra.mrb[0].mxu0 %v1180
        %v1281 = vpop.f32.mrb[0].mxu0
        %v1282 = vadd.f32 %v707, %v1281
        %v1283 = vpop.f32.mrb[0].mxu0
        %v1284 = vpop.f32.mrb[0].mxu0
        %v1285 = vadd.f32 %v707, %v1284
        %v1286 = vpop.f32.mrb[0].mxu0
        %1287 = vmatprep.mubr.bf16.mxu0 0
        %1288 = vmatmul.mubr.bf16.gmra.mrb[0].mxu0 %v1183
        %v1289 = vpop.f32.mrb[0].mxu0
        %v1290 = vadd.f32 %v707, %v1289
        %v1291 = vpop.f32.mrb[0].mxu0
        %v1292 = vpop.f32.mrb[0].mxu0
        %v1293 = vadd.f32 %v707, %v1292
        %v1294 = vpop.f32.mrb[0].mxu0
        %1295 = vmatprep.mubr.bf16.mxu0 0
        %1296 = vmatmul.mubr.bf16.gmra.mrb[0].mxu0 %v1186
        %v1297 = vpop.f32.mrb[0].mxu0
        %v1298 = vadd.f32 %v707, %v1297
        %v1299 = vpop.f32.mrb[0].mxu0
        %v1300 = vpop.f32.mrb[0].mxu0
        %v1301 = vadd.f32 %v707, %v1300
        %v1302 = vpop.f32.mrb[0].mxu0
        %1303 = vmatprep.mubr.bf16.mxu0 0
        %1304 = vmatmul.mubr.bf16.gmra.mrb[0].mxu0 %v1189
        %v1305 = vpop.f32.mrb[0].mxu0
        %v1306 = vadd.f32 %v707, %v1305
        %v1307 = vpop.f32.mrb[0].mxu0
        %v1308 = vpop.f32.mrb[0].mxu0
        %v1309 = vadd.f32 %v707, %v1308
        %v1310 = vpop.f32.mrb[0].mxu0
        %1311 = vdwg.mxu0
        %1312 = vmax.xlane.f32.xlu0 %v1250
        %v1313 = vpop.xlane.xlu0 %1312
        %1314 = vmax.xlane.f32.xlu0 %v1253
        %v1315 = vpop.xlane.xlu0 %1314
        %1316 = vmax.xlane.f32.xlu0 %v1258
        %v1317 = vpop.xlane.xlu0 %1316
        %1318 = vmax.xlane.f32.xlu0 %v1261
        %v1319 = vpop.xlane.xlu0 %1318
        %1320 = vmax.xlane.f32.xlu0 %v1266
        %v1321 = vpop.xlane.xlu0 %1320
        %1322 = vmax.xlane.f32.xlu0 %v1269
        %v1323 = vpop.xlane.xlu0 %1322
        %1324 = vmax.xlane.f32.xlu0 %v1274
        %v1325 = vpop.xlane.xlu0 %1324
        %1326 = vmax.xlane.f32.xlu0 %v1277
        %v1327 = vpop.xlane.xlu0 %1326
        %1328 = vmax.xlane.f32.xlu0 %v1282
        %v1329 = vpop.xlane.xlu0 %1328
        %1330 = vmax.xlane.f32.xlu0 %v1285
        %v1331 = vpop.xlane.xlu0 %1330
        %1332 = vmax.xlane.f32.xlu0 %v1290
        %v1333 = vpop.xlane.xlu0 %1332
        %1334 = vmax.xlane.f32.xlu0 %v1293
        %v1335 = vpop.xlane.xlu0 %1334
        %1336 = vmax.xlane.f32.xlu0 %v1298
        %v1337 = vpop.xlane.xlu0 %1336
        %1338 = vmax.xlane.f32.xlu0 %v1301
        %v1339 = vpop.xlane.xlu0 %1338
        %1340 = vmax.xlane.f32.xlu0 %v1306
        %v1341 = vpop.xlane.xlu0 %1340
        %1342 = vmax.xlane.f32.xlu0 %v1309
        %v1343 = vpop.xlane.xlu0 %1342
        %v1344 = vsub.f32 %v1250, %v1313
        %v1345 = vsub.f32 %v1253, %v1315
        %v1346 = vsub.f32 %v1258, %v1317
        %v1347 = vsub.f32 %v1261, %v1319
        %v1348 = vsub.f32 %v1266, %v1321
        %v1349 = vsub.f32 %v1269, %v1323
        %v1350 = vsub.f32 %v1274, %v1325
        %v1351 = vsub.f32 %v1277, %v1327
        %v1352 = vsub.f32 %v1282, %v1329
        %v1353 = vsub.f32 %v1285, %v1331
        %v1354 = vsub.f32 %v1290, %v1333
        %v1355 = vsub.f32 %v1293, %v1335
        %v1356 = vsub.f32 %v1298, %v1337
        %v1357 = vsub.f32 %v1301, %v1339
        %v1358 = vsub.f32 %v1306, %v1341
        %v1359 = vsub.f32 %v1309, %v1343
        %v1360 = vmul.f32 %v1344, 1.442695
        %v1361 = vpow.pop %v1360
        %v1362 = vmul.f32 %v1345, 1.442695
        %v1363 = vpow.pop %v1362
        %v1364 = vmul.f32 %v1346, 1.442695
        %v1365 = vpow.pop %v1364
        %v1366 = vmul.f32 %v1347, 1.442695
        %v1367 = vpow.pop %v1366
        %v1368 = vmul.f32 %v1348, 1.442695
        %v1369 = vpow.pop %v1368
        %v1370 = vmul.f32 %v1349, 1.442695
        %v1371 = vpow.pop %v1370
        %v1372 = vmul.f32 %v1350, 1.442695
        %v1373 = vpow.pop %v1372
        %v1374 = vmul.f32 %v1351, 1.442695
        %v1375 = vpow.pop %v1374
        %v1376 = vmul.f32 %v1352, 1.442695
        %v1377 = vpow.pop %v1376
        %v1378 = vmul.f32 %v1353, 1.442695
        %v1379 = vpow.pop %v1378
        %v1380 = vmul.f32 %v1354, 1.442695
        %v1381 = vpow.pop %v1380
        %v1382 = vmul.f32 %v1355, 1.442695
        %v1383 = vpow.pop %v1382
        %v1384 = vmul.f32 %v1356, 1.442695
        %v1385 = vpow.pop %v1384
        %v1386 = vmul.f32 %v1357, 1.442695
        %v1387 = vpow.pop %v1386
        %v1388 = vmul.f32 %v1358, 1.442695
        %v1389 = vpow.pop %v1388
        %v1390 = vmul.f32 %v1359, 1.442695
        %v1391 = vpow.pop %v1390
        %1392 = vadd.xlane.f32.xlu0 %v1361
        %v1393 = vpop.xlane.xlu0 %1392
        %1394 = vadd.xlane.f32.xlu0 %v1363
        %v1395 = vpop.xlane.xlu0 %1394
        %1396 = vadd.xlane.f32.xlu0 %v1365
        %v1397 = vpop.xlane.xlu0 %1396
        %1398 = vadd.xlane.f32.xlu0 %v1367
        %v1399 = vpop.xlane.xlu0 %1398
        %1400 = vadd.xlane.f32.xlu0 %v1369
        %v1401 = vpop.xlane.xlu0 %1400
        %1402 = vadd.xlane.f32.xlu0 %v1371
        %v1403 = vpop.xlane.xlu0 %1402
        %1404 = vadd.xlane.f32.xlu0 %v1373
        %v1405 = vpop.xlane.xlu0 %1404
        %1406 = vadd.xlane.f32.xlu0 %v1375
        %v1407 = vpop.xlane.xlu0 %1406
        %1408 = vadd.xlane.f32.xlu0 %v1377
        %v1409 = vpop.xlane.xlu0 %1408
        %1410 = vadd.xlane.f32.xlu0 %v1379
        %v1411 = vpop.xlane.xlu0 %1410
        %1412 = vadd.xlane.f32.xlu0 %v1381
        %v1413 = vpop.xlane.xlu0 %1412
        %1414 = vadd.xlane.f32.xlu0 %v1383
        %v1415 = vpop.xlane.xlu0 %1414
        %1416 = vadd.xlane.f32.xlu0 %v1385
        %v1417 = vpop.xlane.xlu0 %1416
        %1418 = vadd.xlane.f32.xlu0 %v1387
        %v1419 = vpop.xlane.xlu0 %1418
        %1420 = vadd.xlane.f32.xlu0 %v1389
        %v1421 = vpop.xlane.xlu0 %1420
        %1422 = vadd.xlane.f32.xlu0 %v1391
        %v1423 = vpop.xlane.xlu0 %1422
        %v1424 = vrcp.pop %v1393
        %v1425 = vrcp.pop %v1395
        %v1426 = vrcp.pop %v1397
        %v1427 = vrcp.pop %v1399
        %v1428 = vrcp.pop %v1401
        %v1429 = vrcp.pop %v1403
        %v1430 = vrcp.pop %v1405
        %v1431 = vrcp.pop %v1407
        %v1432 = vrcp.pop %v1409
        %v1433 = vrcp.pop %v1411
        %v1434 = vrcp.pop %v1413
        %v1435 = vrcp.pop %v1415
        %v1436 = vrcp.pop %v1417
        %v1437 = vrcp.pop %v1419
        %v1438 = vrcp.pop %v1421
        %v1439 = vrcp.pop %v1423
        %v1440 = vmul.f32 %v1361, %v1424
        %v1441 = vmul.f32 %v1363, %v1425
        %v1442 = vmul.f32 %v1365, %v1426
        %v1443 = vmul.f32 %v1367, %v1427
        %v1444 = vmul.f32 %v1369, %v1428
        %v1445 = vmul.f32 %v1371, %v1429
        %v1446 = vmul.f32 %v1373, %v1430
        %v1447 = vmul.f32 %v1375, %v1431
        %v1448 = vmul.f32 %v1377, %v1432
        %v1449 = vmul.f32 %v1379, %v1433
        %v1450 = vmul.f32 %v1381, %v1434
        %v1451 = vmul.f32 %v1383, %v1435
        %v1452 = vmul.f32 %v1385, %v1436
        %v1453 = vmul.f32 %v1387, %v1437
        %v1454 = vmul.f32 %v1389, %v1438
        %v1455 = vmul.f32 %v1391, %v1439
        %v1456 = vpack.c.bf16 %v1441, %v1440
        %v1457 = vpack.c.bf16 %v1443, %v1442
        %v1458 = vpack.c.bf16 %v1445, %v1444
        %v1459 = vpack.c.bf16 %v1447, %v1446
        %v1460 = vpack.c.bf16 %v1449, %v1448
        %v1461 = vpack.c.bf16 %v1451, %v1450
        %v1462 = vpack.c.bf16 %v1453, %v1452
        %v1463 = vpack.c.bf16 %v1455, %v1454
        %1472 = vrot.lane.b32.xlu0 %v682, 96
        %v1473 = vpop.permute.xlu0 %1472
        %1474 = vrot.lane.b32.xlu0 %v685, 96
        %v1475 = vpop.permute.xlu0 %1474
        %1476 = vrot.lane.b32.xlu0 %v688, 96
        %v1477 = vpop.permute.xlu0 %1476
        %1478 = vrot.lane.b32.xlu0 %v691, 96
        %v1479 = vpop.permute.xlu0 %1478
        %1480 = vrot.lane.b32.xlu0 %v694, 96
        %v1481 = vpop.permute.xlu0 %1480
        %1482 = vrot.lane.b32.xlu0 %v697, 96
        %v1483 = vpop.permute.xlu0 %1482
        %1484 = vrot.lane.b32.xlu0 %v700, 96
        %v1485 = vpop.permute.xlu0 %1484
        %1486 = vrot.lane.b32.xlu0 %v703, 96
        %v1487 = vpop.permute.xlu0 %1486
        %1496 = vmatprep.subr.bf16.mxu0 0
        %1497 = vmatpush1.bf16.msra.mxu0 %v1473
        %1498 = vmatprep.subr.bf16.mxu0 0
        %1499 = vmatpush1.bf16.msra.mxu0 %v1475
        %1500 = vmatprep.subr.bf16.mxu0 0
        %1501 = vmatpush1.bf16.msra.mxu0 %v1477
        %1502 = vmatprep.subr.bf16.mxu0 0
        %1503 = vmatpush1.bf16.msra.mxu0 %v1479
        %1504 = vmatprep.subr.bf16.mxu0 0
        %1505 = vmatpush1.bf16.msra.mxu0 %v1481
        %1506 = vmatprep.subr.bf16.mxu0 0
        %1507 = vmatpush1.bf16.msra.mxu0 %v1483
        %1508 = vmatprep.subr.bf16.mxu0 0
        %1509 = vmatpush1.bf16.msra.mxu0 %v1485
        %1510 = vmatprep.subr.bf16.mxu0 0
        %1511 = vmatpush1.bf16.msra.mxu0 %v1487
        %1512 = vmatprep.subr.bf16.mxu0 0
        %1513 = vmatpush1.bf16.msra.mxu0 0
        %1514 = vmatprep.subr.bf16.mxu0 0
        %1515 = vmatpush1.bf16.msra.mxu0 0
        %1516 = vmatprep.subr.bf16.mxu0 0
        %1517 = vmatpush1.bf16.msra.mxu0 0
        %1518 = vmatprep.subr.bf16.mxu0 0
        %1519 = vmatpush1.bf16.msra.mxu0 0
        %1520 = vmatprep.subr.bf16.mxu0 0
        %1521 = vmatpush1.bf16.msra.mxu0 0
        %1522 = vmatprep.subr.bf16.mxu0 0
        %1523 = vmatpush1.bf16.msra.mxu0 0
        %1524 = vmatprep.subr.bf16.mxu0 0
        %1525 = vmatpush1.bf16.msra.mxu0 0
        %1526 = vmatprep.subr.bf16.mxu0 0
        %1527 = vmatpush1.bf16.msra.mxu0 0
        %1528 = vmatprep.mubr.bf16.mxu0 0
        %1529 = vmatmul.mubr.bf16.gmra.mrb[0].mxu0 %v1456
        %v1530 = vpop.f32.mrb[0].mxu0
        %v1531 = vadd.f32 0.0, %v1530
        %v1532 = vpop.f32.mrb[0].mxu0
        %v1533 = vpop.f32.mrb[0].mxu0
        %v1534 = vadd.f32 0.0, %v1533
        %v1535 = vpop.f32.mrb[0].mxu0
        %1536 = vmatprep.mubr.bf16.mxu0 0
        %1537 = vmatmul.mubr.bf16.gmra.mrb[0].mxu0 %v1457
        %v1538 = vpop.f32.mrb[0].mxu0
        %v1539 = vadd.f32 0.0, %v1538
        %v1540 = vpop.f32.mrb[0].mxu0
        %v1541 = vpop.f32.mrb[0].mxu0
        %v1542 = vadd.f32 0.0, %v1541
        %v1543 = vpop.f32.mrb[0].mxu0
        %1544 = vmatprep.mubr.bf16.mxu0 0
        %1545 = vmatmul.mubr.bf16.gmra.mrb[0].mxu0 %v1458
        %v1546 = vpop.f32.mrb[0].mxu0
        %v1547 = vadd.f32 0.0, %v1546
        %v1548 = vpop.f32.mrb[0].mxu0
        %v1549 = vpop.f32.mrb[0].mxu0
        %v1550 = vadd.f32 0.0, %v1549
        %v1551 = vpop.f32.mrb[0].mxu0
        %1552 = vmatprep.mubr.bf16.mxu0 0
        %1553 = vmatmul.mubr.bf16.gmra.mrb[0].mxu0 %v1459
        %v1554 = vpop.f32.mrb[0].mxu0
        %v1555 = vadd.f32 0.0, %v1554
        %v1556 = vpop.f32.mrb[0].mxu0
        %v1557 = vpop.f32.mrb[0].mxu0
        %v1558 = vadd.f32 0.0, %v1557
        %v1559 = vpop.f32.mrb[0].mxu0
        %1560 = vmatprep.mubr.bf16.mxu0 0
        %1561 = vmatmul.mubr.bf16.gmra.mrb[0].mxu0 %v1460
        %v1562 = vpop.f32.mrb[0].mxu0
        %v1563 = vadd.f32 0.0, %v1562
        %v1564 = vpop.f32.mrb[0].mxu0
        %v1565 = vpop.f32.mrb[0].mxu0
        %v1566 = vadd.f32 0.0, %v1565
        %v1567 = vpop.f32.mrb[0].mxu0
        %1568 = vmatprep.mubr.bf16.mxu0 0
        %1569 = vmatmul.mubr.bf16.gmra.mrb[0].mxu0 %v1461
        %v1570 = vpop.f32.mrb[0].mxu0
        %v1571 = vadd.f32 0.0, %v1570
        %v1572 = vpop.f32.mrb[0].mxu0
        %v1573 = vpop.f32.mrb[0].mxu0
        %v1574 = vadd.f32 0.0, %v1573
        %v1575 = vpop.f32.mrb[0].mxu0
        %1576 = vmatprep.mubr.bf16.mxu0 0
        %1577 = vmatmul.mubr.bf16.gmra.mrb[0].mxu0 %v1462
        %v1578 = vpop.f32.mrb[0].mxu0
        %v1579 = vadd.f32 0.0, %v1578
        %v1580 = vpop.f32.mrb[0].mxu0
        %v1581 = vpop.f32.mrb[0].mxu0
        %v1582 = vadd.f32 0.0, %v1581
        %v1583 = vpop.f32.mrb[0].mxu0
        %1584 = vmatprep.mubr.bf16.mxu0 0
        %1585 = vmatmul.mubr.bf16.gmra.mrb[0].mxu0 %v1463
        %v1586 = vpop.f32.mrb[0].mxu0
        %v1587 = vadd.f32 0.0, %v1586
        %v1588 = vpop.f32.mrb[0].mxu0
        %v1589 = vpop.f32.mrb[0].mxu0
        %v1590 = vadd.f32 0.0, %v1589
        %v1591 = vpop.f32.mrb[0].mxu0
        %1592 = vdwg.mxu0
        %v1593 = vpack.c.bf16 %v1534, %v1531
        %v1594 = vpack.c.bf16 %v1542, %v1539
        %v1595 = vpack.c.bf16 %v1550, %v1547
        %v1596 = vpack.c.bf16 %v1558, %v1555
        %v1597 = vpack.c.bf16 %v1566, %v1563
        %v1598 = vpack.c.bf16 %v1574, %v1571
        %v1599 = vpack.c.bf16 %v1582, %v1579
        %v1600 = vpack.c.bf16 %v1590, %v1587
        %1609 = vrot.lane.b32.xlu0 %v1593, 32
        %v1610 = vpop.permute.xlu0 %1609
        %1611 = vrot.lane.b32.xlu0 %v1594, 32
        %v1612 = vpop.permute.xlu0 %1611
        %1613 = vrot.lane.b32.xlu0 %v1595, 32
        %v1614 = vpop.permute.xlu0 %1613
        %1615 = vrot.lane.b32.xlu0 %v1596, 32
        %v1616 = vpop.permute.xlu0 %1615
        %1617 = vrot.lane.b32.xlu0 %v1597, 32
        %v1618 = vpop.permute.xlu0 %1617
        %1619 = vrot.lane.b32.xlu0 %v1598, 32
        %v1620 = vpop.permute.xlu0 %1619
        %1621 = vrot.lane.b32.xlu0 %v1599, 32
        %v1622 = vpop.permute.xlu0 %1621
        %1623 = vrot.lane.b32.xlu0 %v1600, 32
        %v1624 = vpop.permute.xlu0 %1623
        %vm1633 = vcmask 523520
        %1634 = vst.msk [vmem:[#allocation2] sm:$0xff] %vm1633, %v1610
        %1635 = vst.msk [vmem:[#allocation2 + $0x8] sm:$0xff] %vm1633, %v1612
        %1636 = vst.msk [vmem:[#allocation2 + $0x10] sm:$0xff] %vm1633, %v1614
        %1637 = vst.msk [vmem:[#allocation2 + $0x18] sm:$0xff] %vm1633, %v1616
        %1638 = vst.msk [vmem:[#allocation2 + $0x20] sm:$0xff] %vm1633, %v1618
        %1639 = vst.msk [vmem:[#allocation2 + $0x28] sm:$0xff] %vm1633, %v1620
        %1640 = vst.msk [vmem:[#allocation2 + $0x30] sm:$0xff] %vm1633, %v1622
        %1641 = vst.msk [vmem:[#allocation2 + $0x38] sm:$0xff] %vm1633, %v1624
        %1642 = vrot.lane.b32.xlu0 %v680, 64
        %v1643 = vpop.permute.xlu0 %1642
        %1644 = vrot.lane.b32.xlu0 %v683, 64
        %v1645 = vpop.permute.xlu0 %1644
        %1646 = vrot.lane.b32.xlu0 %v686, 64
        %v1647 = vpop.permute.xlu0 %1646
        %1648 = vrot.lane.b32.xlu0 %v689, 64
        %v1649 = vpop.permute.xlu0 %1648
        %1650 = vrot.lane.b32.xlu0 %v692, 64
        %v1651 = vpop.permute.xlu0 %1650
        %1652 = vrot.lane.b32.xlu0 %v695, 64
        %v1653 = vpop.permute.xlu0 %1652
        %1654 = vrot.lane.b32.xlu0 %v698, 64
        %v1655 = vpop.permute.xlu0 %1654
        %1656 = vrot.lane.b32.xlu0 %v701, 64
        %v1657 = vpop.permute.xlu0 %1656
        %1658 = vrot.lane.b32.xlu0 %v681, 64
        %v1659 = vpop.permute.xlu0 %1658
        %1660 = vrot.lane.b32.xlu0 %v684, 64
        %v1661 = vpop.permute.xlu0 %1660
        %1662 = vrot.lane.b32.xlu0 %v687, 64
        %v1663 = vpop.permute.xlu0 %1662
        %1664 = vrot.lane.b32.xlu0 %v690, 64
        %v1665 = vpop.permute.xlu0 %1664
        %1666 = vrot.lane.b32.xlu0 %v693, 64
        %v1667 = vpop.permute.xlu0 %1666
        %1668 = vrot.lane.b32.xlu0 %v696, 64
        %v1669 = vpop.permute.xlu0 %1668
        %1670 = vrot.lane.b32.xlu0 %v699, 64
        %v1671 = vpop.permute.xlu0 %1670
        %1672 = vrot.lane.b32.xlu0 %v702, 64
        %v1673 = vpop.permute.xlu0 %1672
        %v1675 = vsel %vm708, %v1643, 0
        %v1678 = vsel %vm708, %v1645, 0
        %v1681 = vsel %vm708, %v1647, 0
        %v1684 = vsel %vm708, %v1649, 0
        %v1687 = vsel %vm708, %v1651, 0
        %v1690 = vsel %vm708, %v1653, 0
        %v1693 = vsel %vm708, %v1655, 0
        %v1696 = vsel %vm708, %v1657, 0
        %v1699 = vsel %vm708, %v1659, 0
        %v1702 = vsel %vm708, %v1661, 0
        %v1705 = vsel %vm708, %v1663, 0
        %v1708 = vsel %vm708, %v1665, 0
        %v1711 = vsel %vm708, %v1667, 0
        %v1714 = vsel %vm708, %v1669, 0
        %v1717 = vsel %vm708, %v1671, 0
        %v1720 = vsel %vm708, %v1673, 0
        %1722 = vmatprep.subr.bf16.mxu0 0
        %1723 = vmatpush1.bf16.xpose.msra.mxu0 %v1699
        %1724 = vmatprep.subr.bf16.mxu0 0
        %1725 = vmatpush1.bf16.xpose.msra.mxu0 %v1702
        %1726 = vmatprep.subr.bf16.mxu0 0
        %1727 = vmatpush1.bf16.xpose.msra.mxu0 %v1705
        %1728 = vmatprep.subr.bf16.mxu0 0
        %1729 = vmatpush1.bf16.xpose.msra.mxu0 %v1708
        %1730 = vmatprep.subr.bf16.mxu0 0
        %1731 = vmatpush1.bf16.xpose.msra.mxu0 %v1711
        %1732 = vmatprep.subr.bf16.mxu0 0
        %1733 = vmatpush1.bf16.xpose.msra.mxu0 %v1714
        %1734 = vmatprep.subr.bf16.mxu0 0
        %1735 = vmatpush1.bf16.xpose.msra.mxu0 %v1717
        %1736 = vmatprep.subr.bf16.mxu0 0
        %1737 = vmatpush1.bf16.xpose.msra.mxu0 %v1720
        %1738 = vmatprep.subr.bf16.mxu0 0
        %1739 = vmatpush1.bf16.xpose.msra.mxu0 0
        %1740 = vmatprep.subr.bf16.mxu0 0
        %1741 = vmatpush1.bf16.xpose.msra.mxu0 0
        %1742 = vmatprep.subr.bf16.mxu0 0
        %1743 = vmatpush1.bf16.xpose.msra.mxu0 0
        %1744 = vmatprep.subr.bf16.mxu0 0
        %1745 = vmatpush1.bf16.xpose.msra.mxu0 0
        %1746 = vmatprep.subr.bf16.mxu0 0
        %1747 = vmatpush1.bf16.xpose.msra.mxu0 0
        %1748 = vmatprep.subr.bf16.mxu0 0
        %1749 = vmatpush1.bf16.xpose.msra.mxu0 0
        %1750 = vmatprep.subr.bf16.mxu0 0
        %1751 = vmatpush1.bf16.xpose.msra.mxu0 0
        %1752 = vmatprep.subr.bf16.mxu0 0
        %1753 = vmatpush1.bf16.xpose.msra.mxu0 0
        %1754 = vmatprep.mubr.bf16.mxu0 0
        %1755 = vmatmul.mubr.bf16.gmra.mrb[0].mxu0 %v1675
        %v1756 = vpop.f32.mrb[0].mxu0
        %v1757 = vadd.f32 %v707, %v1756
        %v1758 = vpop.f32.mrb[0].mxu0
        %v1759 = vpop.f32.mrb[0].mxu0
        %v1760 = vadd.f32 %v707, %v1759
        %v1761 = vpop.f32.mrb[0].mxu0
        %1762 = vmatprep.mubr.bf16.mxu0 0
        %1763 = vmatmul.mubr.bf16.gmra.mrb[0].mxu0 %v1678
        %v1764 = vpop.f32.mrb[0].mxu0
        %v1765 = vadd.f32 %v707, %v1764
        %v1766 = vpop.f32.mrb[0].mxu0
        %v1767 = vpop.f32.mrb[0].mxu0
        %v1768 = vadd.f32 %v707, %v1767
        %v1769 = vpop.f32.mrb[0].mxu0
        %1770 = vmatprep.mubr.bf16.mxu0 0
        %1771 = vmatmul.mubr.bf16.gmra.mrb[0].mxu0 %v1681
        %v1772 = vpop.f32.mrb[0].mxu0
        %v1773 = vadd.f32 %v707, %v1772
        %v1774 = vpop.f32.mrb[0].mxu0
        %v1775 = vpop.f32.mrb[0].mxu0
        %v1776 = vadd.f32 %v707, %v1775
        %v1777 = vpop.f32.mrb[0].mxu0
        %1778 = vmatprep.mubr.bf16.mxu0 0
        %1779 = vmatmul.mubr.bf16.gmra.mrb[0].mxu0 %v1684
        %v1780 = vpop.f32.mrb[0].mxu0
        %v1781 = vadd.f32 %v707, %v1780
        %v1782 = vpop.f32.mrb[0].mxu0
        %v1783 = vpop.f32.mrb[0].mxu0
        %v1784 = vadd.f32 %v707, %v1783
        %v1785 = vpop.f32.mrb[0].mxu0
        %1786 = vmatprep.mubr.bf16.mxu0 0
        %1787 = vmatmul.mubr.bf16.gmra.mrb[0].mxu0 %v1687
        %v1788 = vpop.f32.mrb[0].mxu0
        %v1789 = vadd.f32 %v707, %v1788
        %v1790 = vpop.f32.mrb[0].mxu0
        %v1791 = vpop.f32.mrb[0].mxu0
        %v1792 = vadd.f32 %v707, %v1791
        %v1793 = vpop.f32.mrb[0].mxu0
        %1794 = vmatprep.mubr.bf16.mxu0 0
        %1795 = vmatmul.mubr.bf16.gmra.mrb[0].mxu0 %v1690
        %v1796 = vpop.f32.mrb[0].mxu0
        %v1797 = vadd.f32 %v707, %v1796
        %v1798 = vpop.f32.mrb[0].mxu0
        %v1799 = vpop.f32.mrb[0].mxu0
        %v1800 = vadd.f32 %v707, %v1799
        %v1801 = vpop.f32.mrb[0].mxu0
        %1802 = vmatprep.mubr.bf16.mxu0 0
        %1803 = vmatmul.mubr.bf16.gmra.mrb[0].mxu0 %v1693
        %v1804 = vpop.f32.mrb[0].mxu0
        %v1805 = vadd.f32 %v707, %v1804
        %v1806 = vpop.f32.mrb[0].mxu0
        %v1807 = vpop.f32.mrb[0].mxu0
        %v1808 = vadd.f32 %v707, %v1807
        %v1809 = vpop.f32.mrb[0].mxu0
        %1810 = vmatprep.mubr.bf16.mxu0 0
        %1811 = vmatmul.mubr.bf16.gmra.mrb[0].mxu0 %v1696
        %v1812 = vpop.f32.mrb[0].mxu0
        %v1813 = vadd.f32 %v707, %v1812
        %v1814 = vpop.f32.mrb[0].mxu0
        %v1815 = vpop.f32.mrb[0].mxu0
        %v1816 = vadd.f32 %v707, %v1815
        %v1817 = vpop.f32.mrb[0].mxu0
        %1818 = vdwg.mxu0
        %1819 = vmax.xlane.f32.xlu0 %v1757
        %v1820 = vpop.xlane.xlu0 %1819
        %1821 = vmax.xlane.f32.xlu0 %v1760
        %v1822 = vpop.xlane.xlu0 %1821
        %1823 = vmax.xlane.f32.xlu0 %v1765
        %v1824 = vpop.xlane.xlu0 %1823
        %1825 = vmax.xlane.f32.xlu0 %v1768
        %v1826 = vpop.xlane.xlu0 %1825
        %1827 = vmax.xlane.f32.xlu0 %v1773
        %v1828 = vpop.xlane.xlu0 %1827
        %1829 = vmax.xlane.f32.xlu0 %v1776
        %v1830 = vpop.xlane.xlu0 %1829
        %1831 = vmax.xlane.f32.xlu0 %v1781
        %v1832 = vpop.xlane.xlu0 %1831
        %1833 = vmax.xlane.f32.xlu0 %v1784
        %v1834 = vpop.xlane.xlu0 %1833
        %1835 = vmax.xlane.f32.xlu0 %v1789
        %v1836 = vpop.xlane.xlu0 %1835
        %1837 = vmax.xlane.f32.xlu0 %v1792
        %v1838 = vpop.xlane.xlu0 %1837
        %1839 = vmax.xlane.f32.xlu0 %v1797
        %v1840 = vpop.xlane.xlu0 %1839
        %1841 = vmax.xlane.f32.xlu0 %v1800
        %v1842 = vpop.xlane.xlu0 %1841
        %1843 = vmax.xlane.f32.xlu0 %v1805
        %v1844 = vpop.xlane.xlu0 %1843
        %1845 = vmax.xlane.f32.xlu0 %v1808
        %v1846 = vpop.xlane.xlu0 %1845
        %1847 = vmax.xlane.f32.xlu0 %v1813
        %v1848 = vpop.xlane.xlu0 %1847
        %1849 = vmax.xlane.f32.xlu0 %v1816
        %v1850 = vpop.xlane.xlu0 %1849
        %v1851 = vsub.f32 %v1757, %v1820
        %v1852 = vsub.f32 %v1760, %v1822
        %v1853 = vsub.f32 %v1765, %v1824
        %v1854 = vsub.f32 %v1768, %v1826
        %v1855 = vsub.f32 %v1773, %v1828
        %v1856 = vsub.f32 %v1776, %v1830
        %v1857 = vsub.f32 %v1781, %v1832
        %v1858 = vsub.f32 %v1784, %v1834
        %v1859 = vsub.f32 %v1789, %v1836
        %v1860 = vsub.f32 %v1792, %v1838
        %v1861 = vsub.f32 %v1797, %v1840
        %v1862 = vsub.f32 %v1800, %v1842
        %v1863 = vsub.f32 %v1805, %v1844
        %v1864 = vsub.f32 %v1808, %v1846
        %v1865 = vsub.f32 %v1813, %v1848
        %v1866 = vsub.f32 %v1816, %v1850
        %v1867 = vmul.f32 %v1851, 1.442695
        %v1868 = vpow.pop %v1867
        %v1869 = vmul.f32 %v1852, 1.442695
        %v1870 = vpow.pop %v1869
        %v1871 = vmul.f32 %v1853, 1.442695
        %v1872 = vpow.pop %v1871
        %v1873 = vmul.f32 %v1854, 1.442695
        %v1874 = vpow.pop %v1873
        %v1875 = vmul.f32 %v1855, 1.442695
        %v1876 = vpow.pop %v1875
        %v1877 = vmul.f32 %v1856, 1.442695
        %v1878 = vpow.pop %v1877
        %v1879 = vmul.f32 %v1857, 1.442695
        %v1880 = vpow.pop %v1879
        %v1881 = vmul.f32 %v1858, 1.442695
        %v1882 = vpow.pop %v1881
        %v1883 = vmul.f32 %v1859, 1.442695
        %v1884 = vpow.pop %v1883
        %v1885 = vmul.f32 %v1860, 1.442695
        %v1886 = vpow.pop %v1885
        %v1887 = vmul.f32 %v1861, 1.442695
        %v1888 = vpow.pop %v1887
        %v1889 = vmul.f32 %v1862, 1.442695
        %v1890 = vpow.pop %v1889
        %v1891 = vmul.f32 %v1863, 1.442695
        %v1892 = vpow.pop %v1891
        %v1893 = vmul.f32 %v1864, 1.442695
        %v1894 = vpow.pop %v1893
        %v1895 = vmul.f32 %v1865, 1.442695
        %v1896 = vpow.pop %v1895
        %v1897 = vmul.f32 %v1866, 1.442695
        %v1898 = vpow.pop %v1897
        %1899 = vadd.xlane.f32.xlu0 %v1868
        %v1900 = vpop.xlane.xlu0 %1899
        %1901 = vadd.xlane.f32.xlu0 %v1870
        %v1902 = vpop.xlane.xlu0 %1901
        %1903 = vadd.xlane.f32.xlu0 %v1872
        %v1904 = vpop.xlane.xlu0 %1903
        %1905 = vadd.xlane.f32.xlu0 %v1874
        %v1906 = vpop.xlane.xlu0 %1905
        %1907 = vadd.xlane.f32.xlu0 %v1876
        %v1908 = vpop.xlane.xlu0 %1907
        %1909 = vadd.xlane.f32.xlu0 %v1878
        %v1910 = vpop.xlane.xlu0 %1909
        %1911 = vadd.xlane.f32.xlu0 %v1880
        %v1912 = vpop.xlane.xlu0 %1911
        %1913 = vadd.xlane.f32.xlu0 %v1882
        %v1914 = vpop.xlane.xlu0 %1913
        %1915 = vadd.xlane.f32.xlu0 %v1884
        %v1916 = vpop.xlane.xlu0 %1915
        %1917 = vadd.xlane.f32.xlu0 %v1886
        %v1918 = vpop.xlane.xlu0 %1917
        %1919 = vadd.xlane.f32.xlu0 %v1888
        %v1920 = vpop.xlane.xlu0 %1919
        %1921 = vadd.xlane.f32.xlu0 %v1890
        %v1922 = vpop.xlane.xlu0 %1921
        %1923 = vadd.xlane.f32.xlu0 %v1892
        %v1924 = vpop.xlane.xlu0 %1923
        %1925 = vadd.xlane.f32.xlu0 %v1894
        %v1926 = vpop.xlane.xlu0 %1925
        %1927 = vadd.xlane.f32.xlu0 %v1896
        %v1928 = vpop.xlane.xlu0 %1927
        %1929 = vadd.xlane.f32.xlu0 %v1898
        %v1930 = vpop.xlane.xlu0 %1929
        %v1931 = vrcp.pop %v1900
        %v1932 = vrcp.pop %v1902
        %v1933 = vrcp.pop %v1904
        %v1934 = vrcp.pop %v1906
        %v1935 = vrcp.pop %v1908
        %v1936 = vrcp.pop %v1910
        %v1937 = vrcp.pop %v1912
        %v1938 = vrcp.pop %v1914
        %v1939 = vrcp.pop %v1916
        %v1940 = vrcp.pop %v1918
        %v1941 = vrcp.pop %v1920
        %v1942 = vrcp.pop %v1922
        %v1943 = vrcp.pop %v1924
        %v1944 = vrcp.pop %v1926
        %v1945 = vrcp.pop %v1928
        %v1946 = vrcp.pop %v1930
        %v1947 = vmul.f32 %v1868, %v1931
        %v1948 = vmul.f32 %v1870, %v1932
        %v1949 = vmul.f32 %v1872, %v1933
        %v1950 = vmul.f32 %v1874, %v1934
        %v1951 = vmul.f32 %v1876, %v1935
        %v1952 = vmul.f32 %v1878, %v1936
        %v1953 = vmul.f32 %v1880, %v1937
        %v1954 = vmul.f32 %v1882, %v1938
        %v1955 = vmul.f32 %v1884, %v1939
        %v1956 = vmul.f32 %v1886, %v1940
        %v1957 = vmul.f32 %v1888, %v1941
        %v1958 = vmul.f32 %v1890, %v1942
        %v1959 = vmul.f32 %v1892, %v1943
        %v1960 = vmul.f32 %v1894, %v1944
        %v1961 = vmul.f32 %v1896, %v1945
        %v1962 = vmul.f32 %v1898, %v1946
        %v1963 = vpack.c.bf16 %v1948, %v1947
        %v1964 = vpack.c.bf16 %v1950, %v1949
        %v1965 = vpack.c.bf16 %v1952, %v1951
        %v1966 = vpack.c.bf16 %v1954, %v1953
        %v1967 = vpack.c.bf16 %v1956, %v1955
        %v1968 = vpack.c.bf16 %v1958, %v1957
        %v1969 = vpack.c.bf16 %v1960, %v1959
        %v1970 = vpack.c.bf16 %v1962, %v1961
        %1971 = vrot.lane.b32.xlu0 %v682, 64
        %v1972 = vpop.permute.xlu0 %1971
        %1973 = vrot.lane.b32.xlu0 %v685, 64
        %v1974 = vpop.permute.xlu0 %1973
        %1975 = vrot.lane.b32.xlu0 %v688, 64
        %v1976 = vpop.permute.xlu0 %1975
        %1977 = vrot.lane.b32.xlu0 %v691, 64
        %v1978 = vpop.permute.xlu0 %1977
        %1979 = vrot.lane.b32.xlu0 %v694, 64
        %v1980 = vpop.permute.xlu0 %1979
        %1981 = vrot.lane.b32.xlu0 %v697, 64
        %v1982 = vpop.permute.xlu0 %1981
        %1983 = vrot.lane.b32.xlu0 %v700, 64
        %v1984 = vpop.permute.xlu0 %1983
        %1985 = vrot.lane.b32.xlu0 %v703, 64
        %v1986 = vpop.permute.xlu0 %1985
        %1995 = vmatprep.subr.bf16.mxu0 0
        %1996 = vmatpush1.bf16.msra.mxu0 %v1972
        %1997 = vmatprep.subr.bf16.mxu0 0
        %1998 = vmatpush1.bf16.msra.mxu0 %v1974
        %1999 = vmatprep.subr.bf16.mxu0 0
        %2000 = vmatpush1.bf16.msra.mxu0 %v1976
        %2001 = vmatprep.subr.bf16.mxu0 0
        %2002 = vmatpush1.bf16.msra.mxu0 %v1978
        %2003 = vmatprep.subr.bf16.mxu0 0
        %2004 = vmatpush1.bf16.msra.mxu0 %v1980
        %2005 = vmatprep.subr.bf16.mxu0 0
        %2006 = vmatpush1.bf16.msra.mxu0 %v1982
        %2007 = vmatprep.subr.bf16.mxu0 0
        %2008 = vmatpush1.bf16.msra.mxu0 %v1984
        %2009 = vmatprep.subr.bf16.mxu0 0
        %2010 = vmatpush1.bf16.msra.mxu0 %v1986
        %2011 = vmatprep.subr.bf16.mxu0 0
        %2012 = vmatpush1.bf16.msra.mxu0 0
        %2013 = vmatprep.subr.bf16.mxu0 0
        %2014 = vmatpush1.bf16.msra.mxu0 0
        %2015 = vmatprep.subr.bf16.mxu0 0
        %2016 = vmatpush1.bf16.msra.mxu0 0
        %2017 = vmatprep.subr.bf16.mxu0 0
        %2018 = vmatpush1.bf16.msra.mxu0 0
        %2019 = vmatprep.subr.bf16.mxu0 0
        %2020 = vmatpush1.bf16.msra.mxu0 0
        %2021 = vmatprep.subr.bf16.mxu0 0
        %2022 = vmatpush1.bf16.msra.mxu0 0
        %2023 = vmatprep.subr.bf16.mxu0 0
        %2024 = vmatpush1.bf16.msra.mxu0 0
        %2025 = vmatprep.subr.bf16.mxu0 0
        %2026 = vmatpush1.bf16.msra.mxu0 0
        %2027 = vmatprep.mubr.bf16.mxu0 0
        %2028 = vmatmul.mubr.bf16.gmra.mrb[0].mxu0 %v1963
        %v2029 = vpop.f32.mrb[0].mxu0
        %v2030 = vadd.f32 0.0, %v2029
        %v2031 = vpop.f32.mrb[0].mxu0
        %v2032 = vpop.f32.mrb[0].mxu0
        %v2033 = vadd.f32 0.0, %v2032
        %v2034 = vpop.f32.mrb[0].mxu0
        %2035 = vmatprep.mubr.bf16.mxu0 0
        %2036 = vmatmul.mubr.bf16.gmra.mrb[0].mxu0 %v1964
        %v2037 = vpop.f32.mrb[0].mxu0
        %v2038 = vadd.f32 0.0, %v2037
        %v2039 = vpop.f32.mrb[0].mxu0
        %v2040 = vpop.f32.mrb[0].mxu0
        %v2041 = vadd.f32 0.0, %v2040
        %v2042 = vpop.f32.mrb[0].mxu0
        %2043 = vmatprep.mubr.bf16.mxu0 0
        %2044 = vmatmul.mubr.bf16.gmra.mrb[0].mxu0 %v1965
        %v2045 = vpop.f32.mrb[0].mxu0
        %v2046 = vadd.f32 0.0, %v2045
        %v2047 = vpop.f32.mrb[0].mxu0
        %v2048 = vpop.f32.mrb[0].mxu0
        %v2049 = vadd.f32 0.0, %v2048
        %v2050 = vpop.f32.mrb[0].mxu0
        %2051 = vmatprep.mubr.bf16.mxu0 0
        %2052 = vmatmul.mubr.bf16.gmra.mrb[0].mxu0 %v1966
        %v2053 = vpop.f32.mrb[0].mxu0
        %v2054 = vadd.f32 0.0, %v2053
        %v2055 = vpop.f32.mrb[0].mxu0
        %v2056 = vpop.f32.mrb[0].mxu0
        %v2057 = vadd.f32 0.0, %v2056
        %v2058 = vpop.f32.mrb[0].mxu0
        %2059 = vmatprep.mubr.bf16.mxu0 0
        %2060 = vmatmul.mubr.bf16.gmra.mrb[0].mxu0 %v1967
        %v2061 = vpop.f32.mrb[0].mxu0
        %v2062 = vadd.f32 0.0, %v2061
        %v2063 = vpop.f32.mrb[0].mxu0
        %v2064 = vpop.f32.mrb[0].mxu0
        %v2065 = vadd.f32 0.0, %v2064
        %v2066 = vpop.f32.mrb[0].mxu0
        %2067 = vmatprep.mubr.bf16.mxu0 0
        %2068 = vmatmul.mubr.bf16.gmra.mrb[0].mxu0 %v1968
        %v2069 = vpop.f32.mrb[0].mxu0
        %v2070 = vadd.f32 0.0, %v2069
        %v2071 = vpop.f32.mrb[0].mxu0
        %v2072 = vpop.f32.mrb[0].mxu0
        %v2073 = vadd.f32 0.0, %v2072
        %v2074 = vpop.f32.mrb[0].mxu0
        %2075 = vmatprep.mubr.bf16.mxu0 0
        %2076 = vmatmul.mubr.bf16.gmra.mrb[0].mxu0 %v1969
        %v2077 = vpop.f32.mrb[0].mxu0
        %v2078 = vadd.f32 0.0, %v2077
        %v2079 = vpop.f32.mrb[0].mxu0
        %v2080 = vpop.f32.mrb[0].mxu0
        %v2081 = vadd.f32 0.0, %v2080
        %v2082 = vpop.f32.mrb[0].mxu0
        %2083 = vmatprep.mubr.bf16.mxu0 0
        %2084 = vmatmul.mubr.bf16.gmra.mrb[0].mxu0 %v1970
        %v2085 = vpop.f32.mrb[0].mxu0
        %v2086 = vadd.f32 0.0, %v2085
        %v2087 = vpop.f32.mrb[0].mxu0
        %v2088 = vpop.f32.mrb[0].mxu0
        %v2089 = vadd.f32 0.0, %v2088
        %v2090 = vpop.f32.mrb[0].mxu0
        %2091 = vdwg.mxu0
        %v2092 = vpack.c.bf16 %v2033, %v2030
        %v2093 = vpack.c.bf16 %v2041, %v2038
        %v2094 = vpack.c.bf16 %v2049, %v2046
        %v2095 = vpack.c.bf16 %v2057, %v2054
        %v2096 = vpack.c.bf16 %v2065, %v2062
        %v2097 = vpack.c.bf16 %v2073, %v2070
        %v2098 = vpack.c.bf16 %v2081, %v2078
        %v2099 = vpack.c.bf16 %v2089, %v2086
        %2108 = vrot.lane.b32.xlu0 %v2092, 64
        %v2109 = vpop.permute.xlu0 %2108
        %2110 = vrot.lane.b32.xlu0 %v2093, 64
        %v2111 = vpop.permute.xlu0 %2110
        %2112 = vrot.lane.b32.xlu0 %v2094, 64
        %v2113 = vpop.permute.xlu0 %2112
        %2114 = vrot.lane.b32.xlu0 %v2095, 64
        %v2115 = vpop.permute.xlu0 %2114
        %2116 = vrot.lane.b32.xlu0 %v2096, 64
        %v2117 = vpop.permute.xlu0 %2116
        %2118 = vrot.lane.b32.xlu0 %v2097, 64
        %v2119 = vpop.permute.xlu0 %2118
        %2120 = vrot.lane.b32.xlu0 %v2098, 64
        %v2121 = vpop.permute.xlu0 %2120
        %2122 = vrot.lane.b32.xlu0 %v2099, 64
        %v2123 = vpop.permute.xlu0 %2122
        %vm2132 = vcmask 785920
        %2133 = vst.msk [vmem:[#allocation2] sm:$0xff] %vm2132, %v2109
        %2134 = vst.msk [vmem:[#allocation2 + $0x8] sm:$0xff] %vm2132, %v2111
        %2135 = vst.msk [vmem:[#allocation2 + $0x10] sm:$0xff] %vm2132, %v2113
        %2136 = vst.msk [vmem:[#allocation2 + $0x18] sm:$0xff] %vm2132, %v2115
        %2137 = vst.msk [vmem:[#allocation2 + $0x20] sm:$0xff] %vm2132, %v2117
        %2138 = vst.msk [vmem:[#allocation2 + $0x28] sm:$0xff] %vm2132, %v2119
        %2139 = vst.msk [vmem:[#allocation2 + $0x30] sm:$0xff] %vm2132, %v2121
        %2140 = vst.msk [vmem:[#allocation2 + $0x38] sm:$0xff] %vm2132, %v2123
        %2141 = vrot.lane.b32.xlu0 %v680, 32
        %v2142 = vpop.permute.xlu0 %2141
        %2143 = vrot.lane.b32.xlu0 %v683, 32
        %v2144 = vpop.permute.xlu0 %2143
        %2145 = vrot.lane.b32.xlu0 %v686, 32
        %v2146 = vpop.permute.xlu0 %2145
        %2147 = vrot.lane.b32.xlu0 %v689, 32
        %v2148 = vpop.permute.xlu0 %2147
        %2149 = vrot.lane.b32.xlu0 %v692, 32
        %v2150 = vpop.permute.xlu0 %2149
        %2151 = vrot.lane.b32.xlu0 %v695, 32
        %v2152 = vpop.permute.xlu0 %2151
        %2153 = vrot.lane.b32.xlu0 %v698, 32
        %v2154 = vpop.permute.xlu0 %2153
        %2155 = vrot.lane.b32.xlu0 %v701, 32
        %v2156 = vpop.permute.xlu0 %2155
        %2157 = vrot.lane.b32.xlu0 %v681, 32
        %v2158 = vpop.permute.xlu0 %2157
        %2159 = vrot.lane.b32.xlu0 %v684, 32
        %v2160 = vpop.permute.xlu0 %2159
        %2161 = vrot.lane.b32.xlu0 %v687, 32
        %v2162 = vpop.permute.xlu0 %2161
        %2163 = vrot.lane.b32.xlu0 %v690, 32
        %v2164 = vpop.permute.xlu0 %2163
        %2165 = vrot.lane.b32.xlu0 %v693, 32
        %v2166 = vpop.permute.xlu0 %2165
        %2167 = vrot.lane.b32.xlu0 %v696, 32
        %v2168 = vpop.permute.xlu0 %2167
        %2169 = vrot.lane.b32.xlu0 %v699, 32
        %v2170 = vpop.permute.xlu0 %2169
        %2171 = vrot.lane.b32.xlu0 %v702, 32
        %v2172 = vpop.permute.xlu0 %2171
        %v2174 = vsel %vm708, %v2142, 0
        %v2177 = vsel %vm708, %v2144, 0
        %v2180 = vsel %vm708, %v2146, 0
        %v2183 = vsel %vm708, %v2148, 0
        %v2186 = vsel %vm708, %v2150, 0
        %v2189 = vsel %vm708, %v2152, 0
        %v2192 = vsel %vm708, %v2154, 0
        %v2195 = vsel %vm708, %v2156, 0
        %v2198 = vsel %vm708, %v2158, 0
        %v2201 = vsel %vm708, %v2160, 0
        %v2204 = vsel %vm708, %v2162, 0
        %v2207 = vsel %vm708, %v2164, 0
        %v2210 = vsel %vm708, %v2166, 0
        %v2213 = vsel %vm708, %v2168, 0
        %v2216 = vsel %vm708, %v2170, 0
        %v2219 = vsel %vm708, %v2172, 0
        %2221 = vmatprep.subr.bf16.mxu0 0
        %2222 = vmatpush1.bf16.xpose.msra.mxu0 %v2198
        %2223 = vmatprep.subr.bf16.mxu0 0
        %2224 = vmatpush1.bf16.xpose.msra.mxu0 %v2201
        %2225 = vmatprep.subr.bf16.mxu0 0
        %2226 = vmatpush1.bf16.xpose.msra.mxu0 %v2204
        %2227 = vmatprep.subr.bf16.mxu0 0
        %2228 = vmatpush1.bf16.xpose.msra.mxu0 %v2207
        %2229 = vmatprep.subr.bf16.mxu0 0
        %2230 = vmatpush1.bf16.xpose.msra.mxu0 %v2210
        %2231 = vmatprep.subr.bf16.mxu0 0
        %2232 = vmatpush1.bf16.xpose.msra.mxu0 %v2213
        %2233 = vmatprep.subr.bf16.mxu0 0
        %2234 = vmatpush1.bf16.xpose.msra.mxu0 %v2216
        %2235 = vmatprep.subr.bf16.mxu0 0
        %2236 = vmatpush1.bf16.xpose.msra.mxu0 %v2219
        %2237 = vmatprep.subr.bf16.mxu0 0
        %2238 = vmatpush1.bf16.xpose.msra.mxu0 0
        %2239 = vmatprep.subr.bf16.mxu0 0
        %2240 = vmatpush1.bf16.xpose.msra.mxu0 0
        %2241 = vmatprep.subr.bf16.mxu0 0
        %2242 = vmatpush1.bf16.xpose.msra.mxu0 0
        %2243 = vmatprep.subr.bf16.mxu0 0
        %2244 = vmatpush1.bf16.xpose.msra.mxu0 0
        %2245 = vmatprep.subr.bf16.mxu0 0
        %2246 = vmatpush1.bf16.xpose.msra.mxu0 0
        %2247 = vmatprep.subr.bf16.mxu0 0
        %2248 = vmatpush1.bf16.xpose.msra.mxu0 0
        %2249 = vmatprep.subr.bf16.mxu0 0
        %2250 = vmatpush1.bf16.xpose.msra.mxu0 0
        %2251 = vmatprep.subr.bf16.mxu0 0
        %2252 = vmatpush1.bf16.xpose.msra.mxu0 0
        %2253 = vmatprep.mubr.bf16.mxu0 0
        %2254 = vmatmul.mubr.bf16.gmra.mrb[0].mxu0 %v2174
        %v2255 = vpop.f32.mrb[0].mxu0
        %v2256 = vadd.f32 %v707, %v2255
        %v2257 = vpop.f32.mrb[0].mxu0
        %v2258 = vpop.f32.mrb[0].mxu0
        %v2259 = vadd.f32 %v707, %v2258
        %v2260 = vpop.f32.mrb[0].mxu0
        %2261 = vmatprep.mubr.bf16.mxu0 0
        %2262 = vmatmul.mubr.bf16.gmra.mrb[0].mxu0 %v2177
        %v2263 = vpop.f32.mrb[0].mxu0
        %v2264 = vadd.f32 %v707, %v2263
        %v2265 = vpop.f32.mrb[0].mxu0
        %v2266 = vpop.f32.mrb[0].mxu0
        %v2267 = vadd.f32 %v707, %v2266
        %v2268 = vpop.f32.mrb[0].mxu0
        %2269 = vmatprep.mubr.bf16.mxu0 0
        %2270 = vmatmul.mubr.bf16.gmra.mrb[0].mxu0 %v2180
        %v2271 = vpop.f32.mrb[0].mxu0
        %v2272 = vadd.f32 %v707, %v2271
        %v2273 = vpop.f32.mrb[0].mxu0
        %v2274 = vpop.f32.mrb[0].mxu0
        %v2275 = vadd.f32 %v707, %v2274
        %v2276 = vpop.f32.mrb[0].mxu0
        %2277 = vmatprep.mubr.bf16.mxu0 0
        %2278 = vmatmul.mubr.bf16.gmra.mrb[0].mxu0 %v2183
        %v2279 = vpop.f32.mrb[0].mxu0
        %v2280 = vadd.f32 %v707, %v2279
        %v2281 = vpop.f32.mrb[0].mxu0
        %v2282 = vpop.f32.mrb[0].mxu0
        %v2283 = vadd.f32 %v707, %v2282
        %v2284 = vpop.f32.mrb[0].mxu0
        %2285 = vmatprep.mubr.bf16.mxu0 0
        %2286 = vmatmul.mubr.bf16.gmra.mrb[0].mxu0 %v2186
        %v2287 = vpop.f32.mrb[0].mxu0
        %v2288 = vadd.f32 %v707, %v2287
        %v2289 = vpop.f32.mrb[0].mxu0
        %v2290 = vpop.f32.mrb[0].mxu0
        %v2291 = vadd.f32 %v707, %v2290
        %v2292 = vpop.f32.mrb[0].mxu0
        %2293 = vmatprep.mubr.bf16.mxu0 0
        %2294 = vmatmul.mubr.bf16.gmra.mrb[0].mxu0 %v2189
        %v2295 = vpop.f32.mrb[0].mxu0
        %v2296 = vadd.f32 %v707, %v2295
        %v2297 = vpop.f32.mrb[0].mxu0
        %v2298 = vpop.f32.mrb[0].mxu0
        %v2299 = vadd.f32 %v707, %v2298
        %v2300 = vpop.f32.mrb[0].mxu0
        %2301 = vmatprep.mubr.bf16.mxu0 0
        %2302 = vmatmul.mubr.bf16.gmra.mrb[0].mxu0 %v2192
        %v2303 = vpop.f32.mrb[0].mxu0
        %v2304 = vadd.f32 %v707, %v2303
        %v2305 = vpop.f32.mrb[0].mxu0
        %v2306 = vpop.f32.mrb[0].mxu0
        %v2307 = vadd.f32 %v707, %v2306
        %v2308 = vpop.f32.mrb[0].mxu0
        %2309 = vmatprep.mubr.bf16.mxu0 0
        %2310 = vmatmul.mubr.bf16.gmra.mrb[0].mxu0 %v2195
        %v2311 = vpop.f32.mrb[0].mxu0
        %v2312 = vadd.f32 %v707, %v2311
        %v2313 = vpop.f32.mrb[0].mxu0
        %v2314 = vpop.f32.mrb[0].mxu0
        %v2315 = vadd.f32 %v707, %v2314
        %v2316 = vpop.f32.mrb[0].mxu0
        %2317 = vdwg.mxu0
        %2318 = vmax.xlane.f32.xlu0 %v2256
        %v2319 = vpop.xlane.xlu0 %2318
        %2320 = vmax.xlane.f32.xlu0 %v2259
        %v2321 = vpop.xlane.xlu0 %2320
        %2322 = vmax.xlane.f32.xlu0 %v2264
        %v2323 = vpop.xlane.xlu0 %2322
        %2324 = vmax.xlane.f32.xlu0 %v2267
        %v2325 = vpop.xlane.xlu0 %2324
        %2326 = vmax.xlane.f32.xlu0 %v2272
        %v2327 = vpop.xlane.xlu0 %2326
        %2328 = vmax.xlane.f32.xlu0 %v2275
        %v2329 = vpop.xlane.xlu0 %2328
        %2330 = vmax.xlane.f32.xlu0 %v2280
        %v2331 = vpop.xlane.xlu0 %2330
        %2332 = vmax.xlane.f32.xlu0 %v2283
        %v2333 = vpop.xlane.xlu0 %2332
        %2334 = vmax.xlane.f32.xlu0 %v2288
        %v2335 = vpop.xlane.xlu0 %2334
        %2336 = vmax.xlane.f32.xlu0 %v2291
        %v2337 = vpop.xlane.xlu0 %2336
        %2338 = vmax.xlane.f32.xlu0 %v2296
        %v2339 = vpop.xlane.xlu0 %2338
        %2340 = vmax.xlane.f32.xlu0 %v2299
        %v2341 = vpop.xlane.xlu0 %2340
        %2342 = vmax.xlane.f32.xlu0 %v2304
        %v2343 = vpop.xlane.xlu0 %2342
        %2344 = vmax.xlane.f32.xlu0 %v2307
        %v2345 = vpop.xlane.xlu0 %2344
        %2346 = vmax.xlane.f32.xlu0 %v2312
        %v2347 = vpop.xlane.xlu0 %2346
        %2348 = vmax.xlane.f32.xlu0 %v2315
        %v2349 = vpop.xlane.xlu0 %2348
        %v2350 = vsub.f32 %v2256, %v2319
        %v2351 = vsub.f32 %v2259, %v2321
        %v2352 = vsub.f32 %v2264, %v2323
        %v2353 = vsub.f32 %v2267, %v2325
        %v2354 = vsub.f32 %v2272, %v2327
        %v2355 = vsub.f32 %v2275, %v2329
        %v2356 = vsub.f32 %v2280, %v2331
        %v2357 = vsub.f32 %v2283, %v2333
        %v2358 = vsub.f32 %v2288, %v2335
        %v2359 = vsub.f32 %v2291, %v2337
        %v2360 = vsub.f32 %v2296, %v2339
        %v2361 = vsub.f32 %v2299, %v2341
        %v2362 = vsub.f32 %v2304, %v2343
        %v2363 = vsub.f32 %v2307, %v2345
        %v2364 = vsub.f32 %v2312, %v2347
        %v2365 = vsub.f32 %v2315, %v2349
        %v2366 = vmul.f32 %v2350, 1.442695
        %v2367 = vpow.pop %v2366
        %v2368 = vmul.f32 %v2351, 1.442695
        %v2369 = vpow.pop %v2368
        %v2370 = vmul.f32 %v2352, 1.442695
        %v2371 = vpow.pop %v2370
        %v2372 = vmul.f32 %v2353, 1.442695
        %v2373 = vpow.pop %v2372
        %v2374 = vmul.f32 %v2354, 1.442695
        %v2375 = vpow.pop %v2374
        %v2376 = vmul.f32 %v2355, 1.442695
        %v2377 = vpow.pop %v2376
        %v2378 = vmul.f32 %v2356, 1.442695
        %v2379 = vpow.pop %v2378
        %v2380 = vmul.f32 %v2357, 1.442695
        %v2381 = vpow.pop %v2380
        %v2382 = vmul.f32 %v2358, 1.442695
        %v2383 = vpow.pop %v2382
        %v2384 = vmul.f32 %v2359, 1.442695
        %v2385 = vpow.pop %v2384
        %v2386 = vmul.f32 %v2360, 1.442695
        %v2387 = vpow.pop %v2386
        %v2388 = vmul.f32 %v2361, 1.442695
        %v2389 = vpow.pop %v2388
        %v2390 = vmul.f32 %v2362, 1.442695
        %v2391 = vpow.pop %v2390
        %v2392 = vmul.f32 %v2363, 1.442695
        %v2393 = vpow.pop %v2392
        %v2394 = vmul.f32 %v2364, 1.442695
        %v2395 = vpow.pop %v2394
        %v2396 = vmul.f32 %v2365, 1.442695
        %v2397 = vpow.pop %v2396
        %2398 = vadd.xlane.f32.xlu0 %v2367
        %v2399 = vpop.xlane.xlu0 %2398
        %2400 = vadd.xlane.f32.xlu0 %v2369
        %v2401 = vpop.xlane.xlu0 %2400
        %2402 = vadd.xlane.f32.xlu0 %v2371
        %v2403 = vpop.xlane.xlu0 %2402
        %2404 = vadd.xlane.f32.xlu0 %v2373
        %v2405 = vpop.xlane.xlu0 %2404
        %2406 = vadd.xlane.f32.xlu0 %v2375
        %v2407 = vpop.xlane.xlu0 %2406
        %2408 = vadd.xlane.f32.xlu0 %v2377
        %v2409 = vpop.xlane.xlu0 %2408
        %2410 = vadd.xlane.f32.xlu0 %v2379
        %v2411 = vpop.xlane.xlu0 %2410
        %2412 = vadd.xlane.f32.xlu0 %v2381
        %v2413 = vpop.xlane.xlu0 %2412
        %2414 = vadd.xlane.f32.xlu0 %v2383
        %v2415 = vpop.xlane.xlu0 %2414
        %2416 = vadd.xlane.f32.xlu0 %v2385
        %v2417 = vpop.xlane.xlu0 %2416
        %2418 = vadd.xlane.f32.xlu0 %v2387
        %v2419 = vpop.xlane.xlu0 %2418
        %2420 = vadd.xlane.f32.xlu0 %v2389
        %v2421 = vpop.xlane.xlu0 %2420
        %2422 = vadd.xlane.f32.xlu0 %v2391
        %v2423 = vpop.xlane.xlu0 %2422
        %2424 = vadd.xlane.f32.xlu0 %v2393
        %v2425 = vpop.xlane.xlu0 %2424
        %2426 = vadd.xlane.f32.xlu0 %v2395
        %v2427 = vpop.xlane.xlu0 %2426
        %2428 = vadd.xlane.f32.xlu0 %v2397
        %v2429 = vpop.xlane.xlu0 %2428
        %v2430 = vrcp.pop %v2399
        %v2431 = vrcp.pop %v2401
        %v2432 = vrcp.pop %v2403
        %v2433 = vrcp.pop %v2405
        %v2434 = vrcp.pop %v2407
        %v2435 = vrcp.pop %v2409
        %v2436 = vrcp.pop %v2411
        %v2437 = vrcp.pop %v2413
        %v2438 = vrcp.pop %v2415
        %v2439 = vrcp.pop %v2417
        %v2440 = vrcp.pop %v2419
        %v2441 = vrcp.pop %v2421
        %v2442 = vrcp.pop %v2423
        %v2443 = vrcp.pop %v2425
        %v2444 = vrcp.pop %v2427
        %v2445 = vrcp.pop %v2429
        %v2446 = vmul.f32 %v2367, %v2430
        %v2447 = vmul.f32 %v2369, %v2431
        %v2448 = vmul.f32 %v2371, %v2432
        %v2449 = vmul.f32 %v2373, %v2433
        %v2450 = vmul.f32 %v2375, %v2434
        %v2451 = vmul.f32 %v2377, %v2435
        %v2452 = vmul.f32 %v2379, %v2436
        %v2453 = vmul.f32 %v2381, %v2437
        %v2454 = vmul.f32 %v2383, %v2438
        %v2455 = vmul.f32 %v2385, %v2439
        %v2456 = vmul.f32 %v2387, %v2440
        %v2457 = vmul.f32 %v2389, %v2441
        %v2458 = vmul.f32 %v2391, %v2442
        %v2459 = vmul.f32 %v2393, %v2443
        %v2460 = vmul.f32 %v2395, %v2444
        %v2461 = vmul.f32 %v2397, %v2445
        %v2462 = vpack.c.bf16 %v2447, %v2446
        %v2463 = vpack.c.bf16 %v2449, %v2448
        %v2464 = vpack.c.bf16 %v2451, %v2450
        %v2465 = vpack.c.bf16 %v2453, %v2452
        %v2466 = vpack.c.bf16 %v2455, %v2454
        %v2467 = vpack.c.bf16 %v2457, %v2456
        %v2468 = vpack.c.bf16 %v2459, %v2458
        %v2469 = vpack.c.bf16 %v2461, %v2460
        %2470 = vrot.lane.b32.xlu0 %v682, 32
        %v2471 = vpop.permute.xlu0 %2470
        %2472 = vrot.lane.b32.xlu0 %v685, 32
        %v2473 = vpop.permute.xlu0 %2472
        %2474 = vrot.lane.b32.xlu0 %v688, 32
        %v2475 = vpop.permute.xlu0 %2474
        %2476 = vrot.lane.b32.xlu0 %v691, 32
        %v2477 = vpop.permute.xlu0 %2476
        %2478 = vrot.lane.b32.xlu0 %v694, 32
        %v2479 = vpop.permute.xlu0 %2478
        %2480 = vrot.lane.b32.xlu0 %v697, 32
        %v2481 = vpop.permute.xlu0 %2480
        %2482 = vrot.lane.b32.xlu0 %v700, 32
        %v2483 = vpop.permute.xlu0 %2482
        %2484 = vrot.lane.b32.xlu0 %v703, 32
        %v2485 = vpop.permute.xlu0 %2484
        %2494 = vmatprep.subr.bf16.mxu0 0
        %2495 = vmatpush1.bf16.msra.mxu0 %v2471
        %2496 = vmatprep.subr.bf16.mxu0 0
        %2497 = vmatpush1.bf16.msra.mxu0 %v2473
        %2498 = vmatprep.subr.bf16.mxu0 0
        %2499 = vmatpush1.bf16.msra.mxu0 %v2475
        %2500 = vmatprep.subr.bf16.mxu0 0
        %2501 = vmatpush1.bf16.msra.mxu0 %v2477
        %2502 = vmatprep.subr.bf16.mxu0 0
        %2503 = vmatpush1.bf16.msra.mxu0 %v2479
        %2504 = vmatprep.subr.bf16.mxu0 0
        %2505 = vmatpush1.bf16.msra.mxu0 %v2481
        %2506 = vmatprep.subr.bf16.mxu0 0
        %2507 = vmatpush1.bf16.msra.mxu0 %v2483
        %2508 = vmatprep.subr.bf16.mxu0 0
        %2509 = vmatpush1.bf16.msra.mxu0 %v2485
        %2510 = vmatprep.subr.bf16.mxu0 0
        %2511 = vmatpush1.bf16.msra.mxu0 0
        %2512 = vmatprep.subr.bf16.mxu0 0
        %2513 = vmatpush1.bf16.msra.mxu0 0
        %2514 = vmatprep.subr.bf16.mxu0 0
        %2515 = vmatpush1.bf16.msra.mxu0 0
        %2516 = vmatprep.subr.bf16.mxu0 0
        %2517 = vmatpush1.bf16.msra.mxu0 0
        %2518 = vmatprep.subr.bf16.mxu0 0
        %2519 = vmatpush1.bf16.msra.mxu0 0
        %2520 = vmatprep.subr.bf16.mxu0 0
        %2521 = vmatpush1.bf16.msra.mxu0 0
        %2522 = vmatprep.subr.bf16.mxu0 0
        %2523 = vmatpush1.bf16.msra.mxu0 0
        %2524 = vmatprep.subr.bf16.mxu0 0
        %2525 = vmatpush1.bf16.msra.mxu0 0
        %2526 = vmatprep.mubr.bf16.mxu0 0
        %2527 = vmatmul.mubr.bf16.gmra.mrb[0].mxu0 %v2462
        %v2528 = vpop.f32.mrb[0].mxu0
        %v2529 = vadd.f32 0.0, %v2528
        %v2530 = vpop.f32.mrb[0].mxu0
        %v2531 = vpop.f32.mrb[0].mxu0
        %v2532 = vadd.f32 0.0, %v2531
        %v2533 = vpop.f32.mrb[0].mxu0
        %2534 = vmatprep.mubr.bf16.mxu0 0
        %2535 = vmatmul.mubr.bf16.gmra.mrb[0].mxu0 %v2463
        %v2536 = vpop.f32.mrb[0].mxu0
        %v2537 = vadd.f32 0.0, %v2536
        %v2538 = vpop.f32.mrb[0].mxu0
        %v2539 = vpop.f32.mrb[0].mxu0
        %v2540 = vadd.f32 0.0, %v2539
        %v2541 = vpop.f32.mrb[0].mxu0
        %2542 = vmatprep.mubr.bf16.mxu0 0
        %2543 = vmatmul.mubr.bf16.gmra.mrb[0].mxu0 %v2464
        %v2544 = vpop.f32.mrb[0].mxu0
        %v2545 = vadd.f32 0.0, %v2544
        %v2546 = vpop.f32.mrb[0].mxu0
        %v2547 = vpop.f32.mrb[0].mxu0
        %v2548 = vadd.f32 0.0, %v2547
        %v2549 = vpop.f32.mrb[0].mxu0
        %2550 = vmatprep.mubr.bf16.mxu0 0
        %2551 = vmatmul.mubr.bf16.gmra.mrb[0].mxu0 %v2465
        %v2552 = vpop.f32.mrb[0].mxu0
        %v2553 = vadd.f32 0.0, %v2552
        %v2554 = vpop.f32.mrb[0].mxu0
        %v2555 = vpop.f32.mrb[0].mxu0
        %v2556 = vadd.f32 0.0, %v2555
        %v2557 = vpop.f32.mrb[0].mxu0
        %2558 = vmatprep.mubr.bf16.mxu0 0
        %2559 = vmatmul.mubr.bf16.gmra.mrb[0].mxu0 %v2466
        %v2560 = vpop.f32.mrb[0].mxu0
        %v2561 = vadd.f32 0.0, %v2560
        %v2562 = vpop.f32.mrb[0].mxu0
        %v2563 = vpop.f32.mrb[0].mxu0
        %v2564 = vadd.f32 0.0, %v2563
        %v2565 = vpop.f32.mrb[0].mxu0
        %2566 = vmatprep.mubr.bf16.mxu0 0
        %2567 = vmatmul.mubr.bf16.gmra.mrb[0].mxu0 %v2467
        %v2568 = vpop.f32.mrb[0].mxu0
        %v2569 = vadd.f32 0.0, %v2568
        %v2570 = vpop.f32.mrb[0].mxu0
        %v2571 = vpop.f32.mrb[0].mxu0
        %v2572 = vadd.f32 0.0, %v2571
        %v2573 = vpop.f32.mrb[0].mxu0
        %2574 = vmatprep.mubr.bf16.mxu0 0
        %2575 = vmatmul.mubr.bf16.gmra.mrb[0].mxu0 %v2468
        %v2576 = vpop.f32.mrb[0].mxu0
        %v2577 = vadd.f32 0.0, %v2576
        %v2578 = vpop.f32.mrb[0].mxu0
        %v2579 = vpop.f32.mrb[0].mxu0
        %v2580 = vadd.f32 0.0, %v2579
        %v2581 = vpop.f32.mrb[0].mxu0
        %2582 = vmatprep.mubr.bf16.mxu0 0
        %2583 = vmatmul.mubr.bf16.gmra.mrb[0].mxu0 %v2469
        %v2584 = vpop.f32.mrb[0].mxu0
        %v2585 = vadd.f32 0.0, %v2584
        %v2586 = vpop.f32.mrb[0].mxu0
        %v2587 = vpop.f32.mrb[0].mxu0
        %v2588 = vadd.f32 0.0, %v2587
        %v2589 = vpop.f32.mrb[0].mxu0
        %2590 = vdwg.mxu0
        %v2591 = vpack.c.bf16 %v2532, %v2529
        %v2592 = vpack.c.bf16 %v2540, %v2537
        %v2593 = vpack.c.bf16 %v2548, %v2545
        %v2594 = vpack.c.bf16 %v2556, %v2553
        %v2595 = vpack.c.bf16 %v2564, %v2561
        %v2596 = vpack.c.bf16 %v2572, %v2569
        %v2597 = vpack.c.bf16 %v2580, %v2577
        %v2598 = vpack.c.bf16 %v2588, %v2585
        %2607 = vrot.lane.b32.xlu0 %v2591, 96
        %v2608 = vpop.permute.xlu0 %2607
        %2609 = vrot.lane.b32.xlu0 %v2592, 96
        %v2610 = vpop.permute.xlu0 %2609
        %2611 = vrot.lane.b32.xlu0 %v2593, 96
        %v2612 = vpop.permute.xlu0 %2611
        %2613 = vrot.lane.b32.xlu0 %v2594, 96
        %v2614 = vpop.permute.xlu0 %2613
        %2615 = vrot.lane.b32.xlu0 %v2595, 96
        %v2616 = vpop.permute.xlu0 %2615
        %2617 = vrot.lane.b32.xlu0 %v2596, 96
        %v2618 = vpop.permute.xlu0 %2617
        %2619 = vrot.lane.b32.xlu0 %v2597, 96
        %v2620 = vpop.permute.xlu0 %2619
        %2621 = vrot.lane.b32.xlu0 %v2598, 96
        %v2622 = vpop.permute.xlu0 %2621
        %vm2631 = vcmask 1048320
        %2632 = vst.msk [vmem:[#allocation2] sm:$0xff] %vm2631, %v2608
        %2633 = vst.msk [vmem:[#allocation2 + $0x8] sm:$0xff] %vm2631, %v2610
        %2634 = vst.msk [vmem:[#allocation2 + $0x10] sm:$0xff] %vm2631, %v2612
        %2635 = vst.msk [vmem:[#allocation2 + $0x18] sm:$0xff] %vm2631, %v2614
        %2636 = vst.msk [vmem:[#allocation2 + $0x20] sm:$0xff] %vm2631, %v2616
        %2637 = vst.msk [vmem:[#allocation2 + $0x28] sm:$0xff] %vm2631, %v2618
        %2638 = vst.msk [vmem:[#allocation2 + $0x30] sm:$0xff] %vm2631, %v2620
        %2639 = vst.msk [vmem:[#allocation2 + $0x38] sm:$0xff] %vm2631, %v2622
        %v2640 = vld [vmem:[#allocation2] sm:$0xff]
        %v2641 = vld [vmem:[#allocation2 + $0x8] sm:$0xff]
        %v2642 = vld [vmem:[#allocation2 + $0x10] sm:$0xff]
        %v2643 = vld [vmem:[#allocation2 + $0x18] sm:$0xff]
        %v2644 = vld [vmem:[#allocation2 + $0x20] sm:$0xff]
        %v2645 = vld [vmem:[#allocation2 + $0x28] sm:$0xff]
        %v2646 = vld [vmem:[#allocation2 + $0x30] sm:$0xff]
        %v2647 = vld [vmem:[#allocation2 + $0x38] sm:$0xff]
        %v2648 = vld [vmem:[#allocation8] sm:$0xf]
        %v2649 = vld [vmem:[#allocation8 + $0x4] sm:$0xf]
        %v2650 = vld [vmem:[#allocation8 + $0x8] sm:$0xf]
        %v2651 = vld [vmem:[#allocation8 + $0xc] sm:$0xf]
        %v2652 = vld [vmem:[#allocation8 + $0x10] sm:$0xf]
        %v2653 = vld [vmem:[#allocation8 + $0x14] sm:$0xf]
        %v2654 = vld [vmem:[#allocation8 + $0x18] sm:$0xf]
        %v2655 = vld [vmem:[#allocation8 + $0x1c] sm:$0xf]
        %v2656 = vld [vmem:[#allocation8 + $0x20] sm:$0xf]
        %v2657 = vld [vmem:[#allocation8 + $0x24] sm:$0xf]
        %v2658 = vld [vmem:[#allocation8 + $0x28] sm:$0xf]
        %v2659 = vld [vmem:[#allocation8 + $0x2c] sm:$0xf]
        %v2660 = vld [vmem:[#allocation8 + $0x30] sm:$0xf]
        %v2661 = vld [vmem:[#allocation8 + $0x34] sm:$0xf]
        %v2662 = vld [vmem:[#allocation8 + $0x38] sm:$0xf]
        %v2663 = vld [vmem:[#allocation8 + $0x3c] sm:$0xf]
        %v2664 = vld [vmem:[%s3] sm:$0x1]
        %v2666 = vlaneseq
        %v2667 = vshrl.u32 %v2666, 7
        %v2668 = vsub.s32 0, %v2667
        %v2669 = vrot.slane %v2664, %v2668
        %v2687 = vunpack.c.l.b16 %v2648
        %v2688 = vunpack.c.l.b16 %v2649
        %v2689 = vunpack.c.l.b16 %v2650
        %v2690 = vunpack.c.l.b16 %v2651
        %v2691 = vunpack.c.l.b16 %v2652
        %v2692 = vunpack.c.l.b16 %v2653
        %v2693 = vunpack.c.l.b16 %v2654
        %v2694 = vunpack.c.l.b16 %v2655
        %v2695 = vunpack.c.l.b16 %v2656
        %v2696 = vunpack.c.l.b16 %v2657
        %v2697 = vunpack.c.l.b16 %v2658
        %v2698 = vunpack.c.l.b16 %v2659
        %v2699 = vunpack.c.l.b16 %v2660
        %v2700 = vunpack.c.l.b16 %v2661
        %v2701 = vunpack.c.l.b16 %v2662
        %v2702 = vunpack.c.l.b16 %v2663
        %v2703 = vpack.c.b16 %v2688, %v2687
        %v2704 = vpack.c.b16 %v2690, %v2689
        %v2705 = vpack.c.b16 %v2692, %v2691
        %v2706 = vpack.c.b16 %v2694, %v2693
        %v2707 = vpack.c.b16 %v2696, %v2695
        %v2708 = vpack.c.b16 %v2698, %v2697
        %v2709 = vpack.c.b16 %v2700, %v2699
        %v2710 = vpack.c.b16 %v2702, %v2701
        %2719 = vmatprep.subr.bf16.mxu0 0
        %2720 = vmatpush1.bf16.msra.mxu0 %v2703
        %2721 = vmatprep.subr.bf16.mxu0 0
        %2722 = vmatpush1.bf16.msra.mxu0 %v2704
        %2723 = vmatprep.subr.bf16.mxu0 0
        %2724 = vmatpush1.bf16.msra.mxu0 %v2705
        %2725 = vmatprep.subr.bf16.mxu0 0
        %2726 = vmatpush1.bf16.msra.mxu0 %v2706
        %2727 = vmatprep.subr.bf16.mxu0 0
        %2728 = vmatpush1.bf16.msra.mxu0 %v2707
        %2729 = vmatprep.subr.bf16.mxu0 0
        %2730 = vmatpush1.bf16.msra.mxu0 %v2708
        %2731 = vmatprep.subr.bf16.mxu0 0
        %2732 = vmatpush1.bf16.msra.mxu0 %v2709
        %2733 = vmatprep.subr.bf16.mxu0 0
        %2734 = vmatpush1.bf16.msra.mxu0 %v2710
        %2735 = vmatprep.subr.bf16.mxu0 0
        %2736 = vmatpush1.bf16.msra.mxu0 0
        %2737 = vmatprep.subr.bf16.mxu0 0
        %2738 = vmatpush1.bf16.msra.mxu0 0
        %2739 = vmatprep.subr.bf16.mxu0 0
        %2740 = vmatpush1.bf16.msra.mxu0 0
        %2741 = vmatprep.subr.bf16.mxu0 0
        %2742 = vmatpush1.bf16.msra.mxu0 0
        %2743 = vmatprep.subr.bf16.mxu0 0
        %2744 = vmatpush1.bf16.msra.mxu0 0
        %2745 = vmatprep.subr.bf16.mxu0 0
        %2746 = vmatpush1.bf16.msra.mxu0 0
        %2747 = vmatprep.subr.bf16.mxu0 0
        %2748 = vmatpush1.bf16.msra.mxu0 0
        %2749 = vmatprep.subr.bf16.mxu0 0
        %2750 = vmatpush1.bf16.msra.mxu0 0
        %2751 = vmatprep.mubr.bf16.mxu0 0
        %2752 = vmatmul.mubr.bf16.gmra.mrb[0].mxu0 %v2640
        %v2753 = vpop.f32.mrb[0].mxu0
        %v2754 = vadd.f32 %v2669, %v2753
        %v2755 = vpop.f32.mrb[0].mxu0
        %v2756 = vpop.f32.mrb[0].mxu0
        %v2757 = vadd.f32 %v2669, %v2756
        %v2758 = vpop.f32.mrb[0].mxu0
        %2759 = vmatprep.mubr.bf16.mxu0 0
        %2760 = vmatmul.mubr.bf16.gmra.mrb[0].mxu0 %v2641
        %v2761 = vpop.f32.mrb[0].mxu0
        %v2762 = vadd.f32 %v2669, %v2761
        %v2763 = vpop.f32.mrb[0].mxu0
        %v2764 = vpop.f32.mrb[0].mxu0
        %v2765 = vadd.f32 %v2669, %v2764
        %v2766 = vpop.f32.mrb[0].mxu0
        %2767 = vmatprep.mubr.bf16.mxu0 0
        %2768 = vmatmul.mubr.bf16.gmra.mrb[0].mxu0 %v2642
        %v2769 = vpop.f32.mrb[0].mxu0
        %v2770 = vadd.f32 %v2669, %v2769
        %v2771 = vpop.f32.mrb[0].mxu0
        %v2772 = vpop.f32.mrb[0].mxu0
        %v2773 = vadd.f32 %v2669, %v2772
        %v2774 = vpop.f32.mrb[0].mxu0
        %2775 = vmatprep.mubr.bf16.mxu0 0
        %2776 = vmatmul.mubr.bf16.gmra.mrb[0].mxu0 %v2643
        %v2777 = vpop.f32.mrb[0].mxu0
        %v2778 = vadd.f32 %v2669, %v2777
        %v2779 = vpop.f32.mrb[0].mxu0
        %v2780 = vpop.f32.mrb[0].mxu0
        %v2781 = vadd.f32 %v2669, %v2780
        %v2782 = vpop.f32.mrb[0].mxu0
        %2783 = vmatprep.mubr.bf16.mxu0 0
        %2784 = vmatmul.mubr.bf16.gmra.mrb[0].mxu0 %v2644
        %v2785 = vpop.f32.mrb[0].mxu0
        %v2786 = vadd.f32 %v2669, %v2785
        %v2787 = vpop.f32.mrb[0].mxu0
        %v2788 = vpop.f32.mrb[0].mxu0
        %v2789 = vadd.f32 %v2669, %v2788
        %v2790 = vpop.f32.mrb[0].mxu0
        %2791 = vmatprep.mubr.bf16.mxu0 0
        %2792 = vmatmul.mubr.bf16.gmra.mrb[0].mxu0 %v2645
        %v2793 = vpop.f32.mrb[0].mxu0
        %v2794 = vadd.f32 %v2669, %v2793
        %v2795 = vpop.f32.mrb[0].mxu0
        %v2796 = vpop.f32.mrb[0].mxu0
        %v2797 = vadd.f32 %v2669, %v2796
        %v2798 = vpop.f32.mrb[0].mxu0
        %2799 = vmatprep.mubr.bf16.mxu0 0
        %2800 = vmatmul.mubr.bf16.gmra.mrb[0].mxu0 %v2646
        %v2801 = vpop.f32.mrb[0].mxu0
        %v2802 = vadd.f32 %v2669, %v2801
        %v2803 = vpop.f32.mrb[0].mxu0
        %v2804 = vpop.f32.mrb[0].mxu0
        %v2805 = vadd.f32 %v2669, %v2804
        %v2806 = vpop.f32.mrb[0].mxu0
        %2807 = vmatprep.mubr.bf16.mxu0 0
        %2808 = vmatmul.mubr.bf16.gmra.mrb[0].mxu0 %v2647
        %v2809 = vpop.f32.mrb[0].mxu0
        %v2810 = vadd.f32 %v2669, %v2809
        %v2811 = vpop.f32.mrb[0].mxu0
        %v2812 = vpop.f32.mrb[0].mxu0
        %v2813 = vadd.f32 %v2669, %v2812
        %v2814 = vpop.f32.mrb[0].mxu0
        %2815 = vdwg.mxu0
        %2816 = vst [vmem:[%s244] sm:$0xff] %v2754
        %2817 = vst [vmem:[%s244 + $0x8] sm:$0xff] %v2757
        %2818 = vst [vmem:[%s244 + $0x10] sm:$0xff] %v2762
        %2819 = vst [vmem:[%s244 + $0x18] sm:$0xff] %v2765
        %2820 = vst [vmem:[%s244 + $0x20] sm:$0xff] %v2770
        %2821 = vst [vmem:[%s244 + $0x28] sm:$0xff] %v2773
        %2822 = vst [vmem:[%s244 + $0x30] sm:$0xff] %v2778
        %2823 = vst [vmem:[%s244 + $0x38] sm:$0xff] %v2781
        %2824 = vst [vmem:[%s244 + $0x40] sm:$0xff] %v2786
        %2825 = vst [vmem:[%s244 + $0x48] sm:$0xff] %v2789
        %2826 = vst [vmem:[%s244 + $0x50] sm:$0xff] %v2794
        %2827 = vst [vmem:[%s244 + $0x58] sm:$0xff] %v2797
        %2828 = vst [vmem:[%s244 + $0x60] sm:$0xff] %v2802
        %2829 = vst [vmem:[%s244 + $0x68] sm:$0xff] %v2805
        %2830 = vst [vmem:[%s244 + $0x70] sm:$0xff] %v2810
        %2831 = vst [vmem:[%s244 + $0x78] sm:$0xff] %v2813
        %s2832 = sand.u32 %s119, 1
        %s2833 = scalar_lea.sflag [#allocation5], %s2832
        %s2834 = sand.u32 %s119, 1
        %s2835 = smul.addr %s2834, 128
        %s2836 = scalar_lea.vmem [#allocation9], %s2835
        // Predicated region
        $region49: #{tpu_custom_call.1} parent=35 // pred_check
          %p2837 = pneg %p129
        $region50: #{tpu_custom_call.1} parent=35 // pred_check_branch
          %2839 = sbr.rel (%p2837) target = $region52
        $region51: #{tpu_custom_call.1} parent=35 // pred_region
          %s2841 = ssub.s32 2048, 2048
          %2842 = vsyncadd %s2833, %s2841
          %s2843 = smul.addr %s22, 16
          %s2844 = smul.addr %s2843, 128
          %s2845 = scalar_lea.hbm %s4, %s2844
          %s2846 = sshll.u32 %s2836, 4
          %s2847 = int_to_ptr.vmem [resolvable:$true] %s2846
          %2852 = dma.vmem_to_hbm [thread:$0]  %s2847, 2048, %s2845, %s2833, 128, 128, 8
        $region52: #{tpu_custom_call.1} parent=35 // pred_fallthru
          _
      $region36: #{tpu_custom_call.1} parent=5 // pred_fallthru
        _
      %p2853 = scmp.le.s32.totalorder 2, %s17
      // Predicated region
      $region53: #{tpu_custom_call.1} parent=5 // pred_check
        %p2854 = pneg %p2853
      $region54: #{tpu_custom_call.1} parent=5 // pred_check_branch
        %2856 = sbr.rel (%p2854) target = $region56
      $region55: #{tpu_custom_call.1} parent=5 // pred_region
        %s2857 = ssub.s32 %s17, 2
        // Predicated region
        $region57: #{tpu_custom_call.1} parent=55 // pred_check
          %p2858 = pneg %p135
        $region58: #{tpu_custom_call.1} parent=55 // pred_check_branch
          %2860 = sbr.rel (%p2858) target = $region60
        $region59: #{tpu_custom_call.1} parent=55 // pred_region
          %s2861 = sand.u32 %s120, 1
          %s2862 = scalar_lea.sflag [#allocation5], %s2861
          %s2863 = sand.u32 %s120, 1
          %s2864 = smul.addr %s2863, 128
          %s2865 = scalar_lea.vmem [#allocation9], %s2864
          %2866 = dma.done %s2862, 2048
        $region60: #{tpu_custom_call.1} parent=55 // pred_fallthru
          _
      $region56: #{tpu_custom_call.1} parent=5 // pred_fallthru
        _
    $region6: #{tpu_custom_call.1} parent=1 // loop_footer
      %s21 = sadd.s32 1, %s17
    $region7: #{tpu_custom_call.1} parent=1 // loop_footer_branch
      %16 = sbr.rel target = $region3
    $region8: #{tpu_custom_call.1} parent=1 // loop_exit
      _
    %2867 = vsyncpa [#allocation4], 1
    %s2868 = scalar_lea.sflag [#allocation4], 1
    %2869 = vsyncpa %s2868, 1
    %2870 = vsyncpa [#allocation7], 1
    %2871 = vsyncpa [#allocation5], 1
    %s2872 = scalar_lea.sflag [#allocation5], 1
    %2873 = vsyncpa %s2872, 1

</llo_original>
